<compile_context>
chip_gen: v7x
topology: tpu7x:2x2x1
jax: 0.10.0
libtpu: 0.0.40
codegen_flags: <defaults>
</compile_context>

<pallas_src>
import functools

import jax
import jax.numpy as jnp
from jax.experimental import pallas as pl
from jax.experimental.pallas import tpu as pltpu

LANE = 128


def residual_block_kernel(x_ref, halo_ref, w1_ref, b1_ref, w2_ref, b2_ref, o_ref):
    # x_ref   : (1, TL, Cin_p)            bf16  current length tile, rows [S, S+TL)
    # halo_ref: (1, 1, 4, Cin_p)          bf16  [x[S-2], x[S-1], x[S+TL], x[S+TL+1]]
    #                                           (zero where outside the sequence)
    # w1_ref  : (3*Cin_p, Cout_p)         bf16  conv1 taps, K-concatenated
    # b1_ref  : (1, Cout_p)               f32
    # w2_ref  : (3*Cout_p + Cin_p, Cout_p) bf16 conv2 taps + skip, K-concatenated
    # b2_ref  : (1, Cout_p)               f32   (b2 + bs, pre-summed in wrapper)
    # o_ref   : (1, TL, Cout_p)           f32
    tl = x_ref.shape[1]
    t = pl.program_id(1)
    nt = pl.num_programs(1)

    x = x_ref[0]                                  # (TL, Cin_p)  bf16
    halo = halo_ref[0, 0]                         # (4, Cin_p)   bf16
    lm2, lm1 = halo[0:1, :], halo[1:2, :]         # x[S-2], x[S-1]
    rp0, rp1 = halo[2:3, :], halo[3:4, :]         # x[S+TL], x[S+TL+1]

    b1 = b1_ref[...]                              # (1, Cout_p)  f32

    # ---------- conv1 (k=3, pad=1) + ReLU: one K-concatenated MXU matmul ----------
    xm1 = jnp.concatenate([lm1, x[:tl - 1, :]], axis=0)        # x[l-1]
    xp1 = jnp.concatenate([x[1:, :], rp0], axis=0)             # x[l+1]
    x_cat = jnp.concatenate([xm1, x, xp1], axis=1)             # (TL, 3*Cin_p) bf16
    h = jnp.dot(x_cat, w1_ref[...], preferred_element_type=jnp.float32) + b1
    h = jnp.maximum(h, 0.0)                                    # (TL, Cout_p) f32

    # ---------- conv1 boundary rows of the neighbouring tiles (conv2 halo) --------
    # single 2-row matmul; zeroed where conv2's own zero padding applies (l=-1 / l=L)
    edge = jnp.concatenate(
        [jnp.concatenate([lm2, lm1, x[0:1, :]], axis=1),          # conv1 at l = S-1
         jnp.concatenate([x[tl - 1:tl, :], rp0, rp1], axis=1)],   # conv1 at l = S+TL
        axis=0)                                                   # (2, 3*Cin_p) bf16
    h_edge = jnp.maximum(
        jnp.dot(edge, w1_ref[...], preferred_element_type=jnp.float32) + b1, 0.0)
    h_left = (h_edge[0:1, :] * (t > 0).astype(jnp.float32)).astype(jnp.bfloat16)
    h_right = (h_edge[1:2, :] * (t < nt - 1).astype(jnp.float32)).astype(jnp.bfloat16)

    # ---------- conv2 (k=3, pad=1) + skip (1x1): one fused MXU matmul --------------
    hb = h.astype(jnp.bfloat16)                                   # cast once
    hm1 = jnp.concatenate([h_left, hb[:tl - 1, :]], axis=0)       # h[l-1]
    hp1 = jnp.concatenate([hb[1:, :], h_right], axis=0)           # h[l+1]
    y_cat = jnp.concatenate([hm1, hb, hp1, x], axis=1)  # (TL, 3*Cout_p + Cin_p) bf16
    y = jnp.dot(y_cat, w2_ref[...], preferred_element_type=jnp.float32) + b2_ref[...]

    # ---------- residual add already folded in; final ReLU -------------------------
    o_ref[0] = jnp.maximum(y, 0.0)


def _round_up(n, m):
    return (n + m - 1) // m * m


def _pick_tile(L, tl):
    """Largest valid length tile <= tl: must divide L and be sublane-aligned."""
    tl = max(1, min(tl, L))
    if L % tl == 0 and (tl % 8 == 0 or tl == L):
        return tl
    for cand in range(min(tl, L), 7, -1):
        if L % cand == 0 and cand % 8 == 0:
            return cand
    return L  # forced single tile (rare: L with no sublane-aligned divisor <= tl)


@functools.partial(jax.jit, static_argnames=("tl",))
def residual_block_pallas(x_ncl, params, *, tl=512):
    """x_ncl: (B, Cin, L) f32, PyTorch NCL layout.  Returns (B, Cout, L) f32."""
    w1, b1, w2, b2, ws, bs = params
    B, Cin, L = x_ncl.shape
    Cout = w1.shape[0]
    cin_p = _round_up(Cin, LANE)
    cout_p = _round_up(Cout, LANE)

    tl = _pick_tile(L, tl)
    nt = L // tl
    assert nt == 1 or tl >= 2, "length tile must be >= 2 when the sequence is tiled"

    # channels-last, lane-padded, bf16 input (halves HBM read traffic).
    # TODO(synk): for production Cin/Cout << 128, pack multiple length positions per
    # lane group with a block-diagonal weight instead of lane-padding (pad inflates
    # HBM traffic by 128/Cin and wastes >90% of MXU FLOPs on zeros).
    x_blc = jnp.transpose(x_ncl, (0, 2, 1)).astype(jnp.bfloat16)    # (B, L, Cin)
    x_blc = jnp.pad(x_blc, ((0, 0), (0, 0), (0, cin_p - Cin)))      # (B, L, Cin_p)

    # 4 halo rows per tile: x[S-2], x[S-1], x[S+TL], x[S+TL+1] (zeros outside seq)
    zrow = jnp.zeros((B, 1, cin_p), x_blc.dtype)
    if nt > 1:
        lm2 = jnp.concatenate([zrow, x_blc[:, tl - 2::tl, :][:, :nt - 1]], axis=1)
        lm1 = jnp.concatenate([zrow, x_blc[:, tl - 1::tl, :][:, :nt - 1]], axis=1)
        rp0 = jnp.concatenate([x_blc[:, tl::tl, :][:, :nt - 1], zrow], axis=1)
        rp1 = jnp.concatenate([x_blc[:, tl + 1::tl, :][:, :nt - 1], zrow], axis=1)
    else:
        lm2 = lm1 = rp0 = rp1 = zrow
    halo = jnp.stack([lm2, lm1, rp0, rp1], axis=2)                  # (B, nt, 4, Cin_p)

    def tap(w, k, ci, ci_p, co, co_p):
        # w: (Cout, Cin, K) PyTorch layout -> (Cin_p, Cout_p) matmul operand for tap k
        return jnp.pad(w[:, :, k].T, ((0, ci_p - ci), (0, co_p - co)))

    # conv1: K-concatenated weight, rows ordered to match [x[l-1], x[l], x[l+1]]
    w1_cat = jnp.concatenate(
        [tap(w1, k, Cin, cin_p, Cout, cout_p) for k in range(3)], axis=0
    ).astype(jnp.bfloat16)                                          # (3*Cin_p, Cout_p)

    # conv2 + skip fused: rows ordered to match [h[l-1], h[l], h[l+1], x[l]]
    w2s_cat = jnp.concatenate(
        [tap(w2, k, Cout, cout_p, Cout, cout_p) for k in range(3)]
        + [tap(ws, 0, Cin, cin_p, Cout, cout_p)], axis=0
    ).astype(jnp.bfloat16)                                  # (3*Cout_p+Cin_p, Cout_p)

    def prep_b(b):
        return jnp.pad(b, (0, cout_p - Cout)).reshape(1, cout_p).astype(jnp.float32)

    b1_r = prep_b(b1)
    b2s_r = prep_b(b2 + bs)                        # conv2 + skip biases pre-summed

    # scoped-VMEM budget: double-buffered x/halo/out tiles + single-buffered weights
    # + in-kernel concatenated operands / f32 h, with 2x headroom (capped for v7x).
    k1, k2 = 3 * cin_p, 3 * cout_p + cin_p
    vmem_need = (2 * (tl * cin_p * 2 + 4 * cin_p * 2 + tl * cout_p * 4)
                 + (k1 + k2) * cout_p * 2 + 2 * cout_p * 4
                 + 2 * tl * (k1 + k2) * 2 + 2 * tl * cout_p * 4)
    vmem_limit = int(min(64 * 2 ** 20, max(16 * 2 ** 20, 2 * vmem_need)))

    out = pl.pallas_call(
        residual_block_kernel,
        out_shape=jax.ShapeDtypeStruct((B, L, cout_p), jnp.float32),
        grid_spec=pltpu.PrefetchScalarGridSpec(
            num_scalar_prefetch=0,
            grid=(B, nt),
            in_specs=[
                pl.BlockSpec((1, tl, cin_p), lambda b, t: (b, t, 0)),
                pl.BlockSpec((1, 1, 4, cin_p), lambda b, t: (b, t, 0, 0)),
                # grid-invariant operands: single-buffer to reclaim VMEM
                pl.BlockSpec((3 * cin_p, cout_p), lambda b, t: (0, 0),
                             pipeline_mode=pl.Buffered(1)),
                pl.BlockSpec((1, cout_p), lambda b, t: (0, 0),
                             pipeline_mode=pl.Buffered(1)),
                pl.BlockSpec((3 * cout_p + cin_p, cout_p), lambda b, t: (0, 0),
                             pipeline_mode=pl.Buffered(1)),
                pl.BlockSpec((1, cout_p), lambda b, t: (0, 0),
                             pipeline_mode=pl.Buffered(1)),
            ],
            out_specs=pl.BlockSpec((1, tl, cout_p), lambda b, t: (b, t, 0)),
        ),
        compiler_params=pltpu.CompilerParams(
            dimension_semantics=("parallel", "parallel"),
            vmem_limit_bytes=vmem_limit),
    )(x_blc, halo, w1_cat, b1_r, w2s_cat, b2s_r)

    # drop lane padding, back to PyTorch NCL (f32 to preserve module semantics).
    # TODO(synk): emit (B, L, Cout) channels-last (and/or bf16) directly and fuse into
    # the consumer to avoid the padded-f32 writeback + slice/transpose HBM round trip.
    return jnp.transpose(out[:, :, :Cout], (0, 2, 1))


# ----------------------------- pure-JAX reference -----------------------------
def conv1d_ref(x, w, b, padding):
    # x: (B, Cin, L), w: (Cout, Cin, K) — PyTorch semantics
    y = jax.lax.conv_general_dilated(
        x, w, window_strides=(1,), padding=[(padding, padding)],
        dimension_numbers=("NCH", "OIH", "NCH"))
    return y + b[None, :, None]


def residual_block_ref(x, params):
    w1, b1, w2, b2, ws, bs = params
    skip = conv1d_ref(x, ws, bs, padding=0)
    h = jax.nn.relu(conv1d_ref(x, w1, b1, padding=1))
    y = conv1d_ref(h, w2, b2, padding=1)
    return jax.nn.relu(y + skip)


if __name__ == "__main__":
    # small channels (far below lane width, as in the module); L / tl chosen so the
    # grid has first / interior / last length tiles (tl=128 -> 4 tiles).
    B, Cin, Cout, L = 2, 4, 8, 512

    key = jax.random.PRNGKey(0)
    k_x, k1, k2, k3, k4, k5, k6 = jax.random.split(key, 7)

    x = jax.random.normal(k_x, (B, Cin, L), dtype=jnp.float32)

    # deterministic synthetic parameters (PyTorch weight layouts)
    w1 = 0.1 * jax.random.normal(k1, (Cout, Cin, 3), dtype=jnp.float32)
    b1 = 0.1 * jax.random.normal(k2, (Cout,), dtype=jnp.float32)
    w2 = 0.1 * jax.random.normal(k3, (Cout, Cout, 3), dtype=jnp.float32)
    b2 = 0.1 * jax.random.normal(k4, (Cout,), dtype=jnp.float32)
    ws = 0.1 * jax.random.normal(k5, (Cout, Cin, 1), dtype=jnp.float32)
    bs = 0.1 * jax.random.normal(k6, (Cout,), dtype=jnp.float32)

    params = (w1, b1, w2, b2, ws, bs)

    out = residual_block_pallas(x, params, tl=128)
    out = jax.block_until_ready(out)

    ref = residual_block_ref(x, params)
    assert out.shape == (B, Cout, L)
    # bf16 input + bf16 MXU operands inside the kernel -> relaxed tolerance vs f32 ref
    assert jnp.allclose(out, ref, atol=2e-2, rtol=2e-2), "mismatch vs reference"

    print("KERNEL_OK")
</pallas_src>

<mosaic_0001>
module attributes {stable_mosaic.version = 11 : i64} {
  func.func @residual_block_kernel(%arg0: i32, %arg1: i32, %arg2: memref<1x128x128xbf16, #tpu.memory_space<vmem>>, %arg3: memref<1x1x4x128xbf16, #tpu.memory_space<vmem>>, %arg4: memref<384x128xbf16, #tpu.memory_space<vmem>>, %arg5: memref<1x128xf32, #tpu.memory_space<vmem>>, %arg6: memref<512x128xbf16, #tpu.memory_space<vmem>>, %arg7: memref<1x128xf32, #tpu.memory_space<vmem>>, %arg8: memref<1x128x128xf32, #tpu.memory_space<vmem>>) attributes {dimension_semantics = [#tpu.dimension_semantics<parallel>, #tpu.dimension_semantics<parallel>], iteration_bounds = array<i64: 2, 4>, scalar_prefetch = 0 : i64, scratch_operands = 0 : i64, tpu.core_type = #tpu.core_type<tc>, window_params = [{transform_indices = @transform_0, window_bounds = array<i64: 1, 128, 128>}, {transform_indices = @transform_1, window_bounds = array<i64: 1, 1, 4, 128>}, {pipeline_mode = #tpu.pipeline_mode<synchronous>, transform_indices = @transform_2, window_bounds = array<i64: 384, 128>}, {pipeline_mode = #tpu.pipeline_mode<synchronous>, transform_indices = @transform_3, window_bounds = array<i64: 1, 128>}, {pipeline_mode = #tpu.pipeline_mode<synchronous>, transform_indices = @transform_4, window_bounds = array<i64: 512, 128>}, {pipeline_mode = #tpu.pipeline_mode<synchronous>, transform_indices = @transform_5, window_bounds = array<i64: 1, 128>}, {transform_indices = @transform_6, window_bounds = array<i64: 1, 128, 128>}]} {
    %c0 = arith.constant 0 : index
    %c0_0 = arith.constant 0 : index
    %c0_1 = arith.constant 0 : index
    %0 = vector.load %arg2[%c0, %c0_0, %c0_1] : memref<1x128x128xbf16, #tpu.memory_space<vmem>>, vector<1x128x128xbf16>
    %1 = vector.shape_cast %0 : vector<1x128x128xbf16> to vector<128x128xbf16>
    %c0_2 = arith.constant 0 : index
    %c0_3 = arith.constant 0 : index
    %c0_4 = arith.constant 0 : index
    %c0_5 = arith.constant 0 : index
    %2 = vector.load %arg3[%c0_2, %c0_3, %c0_4, %c0_5] : memref<1x1x4x128xbf16, #tpu.memory_space<vmem>>, vector<1x1x4x128xbf16>
    %3 = vector.shape_cast %2 : vector<1x1x4x128xbf16> to vector<4x128xbf16>
    %4 = vector.extract_strided_slice %3 {offsets = [0, 0], sizes = [1, 128], strides = [1, 1]} : vector<4x128xbf16> to vector<1x128xbf16>
    %5 = vector.extract_strided_slice %3 {offsets = [1, 0], sizes = [1, 128], strides = [1, 1]} : vector<4x128xbf16> to vector<1x128xbf16>
    %6 = vector.extract_strided_slice %3 {offsets = [2, 0], sizes = [1, 128], strides = [1, 1]} : vector<4x128xbf16> to vector<1x128xbf16>
    %7 = vector.extract_strided_slice %3 {offsets = [3, 0], sizes = [1, 128], strides = [1, 1]} : vector<4x128xbf16> to vector<1x128xbf16>
    %c0_6 = arith.constant 0 : index
    %c0_7 = arith.constant 0 : index
    %8 = vector.load %arg5[%c0_6, %c0_7] : memref<1x128xf32, #tpu.memory_space<vmem>>, vector<1x128xf32>
    %9 = vector.extract_strided_slice %1 {offsets = [0, 0], sizes = [127, 128], strides = [1, 1]} : vector<128x128xbf16> to vector<127x128xbf16>
    %10 = tpu.concatenate %5, %9 in 0 : vector<1x128xbf16>, vector<127x128xbf16> -> vector<128x128xbf16>
    %11 = vector.extract_strided_slice %1 {offsets = [1, 0], sizes = [127, 128], strides = [1, 1]} : vector<128x128xbf16> to vector<127x128xbf16>
    %12 = tpu.concatenate %11, %6 in 0 : vector<127x128xbf16>, vector<1x128xbf16> -> vector<128x128xbf16>
    %13 = tpu.concatenate %10, %1, %12 in 1 : vector<128x128xbf16>, vector<128x128xbf16>, vector<128x128xbf16> -> vector<128x384xbf16>
    %c0_8 = arith.constant 0 : index
    %c0_9 = arith.constant 0 : index
    %14 = vector.load %arg4[%c0_8, %c0_9] : memref<384x128xbf16, #tpu.memory_space<vmem>>, vector<384x128xbf16>
    %cst = arith.constant dense<0.000000e+00> : vector<128x128xf32>
    %15 = tpu.matmul %13, %14, %cst {dimension_numbers = #tpu.dot_dimension_numbers<[1], [0], [0], [1], [0, 0, 1, 1], [], []>} : vector<128x384xbf16>, vector<384x128xbf16>, vector<128x128xf32> -> vector<128x128xf32>
    %16 = vector.broadcast %8 : vector<1x128xf32> to vector<128x128xf32>
    %17 = arith.addf %15, %16 : vector<128x128xf32>
    %cst_10 = arith.constant 0.000000e+00 : f32
    %18 = vector.broadcast %cst_10 : f32 to vector<128x128xf32>
    %19 = arith.maximumf %17, %18 : vector<128x128xf32>
    %20 = vector.extract_strided_slice %1 {offsets = [0, 0], sizes = [1, 128], strides = [1, 1]} : vector<128x128xbf16> to vector<1x128xbf16>
    %21 = tpu.concatenate %4, %5, %20 in 1 : vector<1x128xbf16>, vector<1x128xbf16>, vector<1x128xbf16> -> vector<1x384xbf16>
    %22 = vector.extract_strided_slice %1 {offsets = [127, 0], sizes = [1, 128], strides = [1, 1]} : vector<128x128xbf16> to vector<1x128xbf16>
    %23 = tpu.concatenate %22, %6, %7 in 1 : vector<1x128xbf16>, vector<1x128xbf16>, vector<1x128xbf16> -> vector<1x384xbf16>
    %24 = tpu.concatenate %21, %23 in 0 : vector<1x384xbf16>, vector<1x384xbf16> -> vector<2x384xbf16>
    %c0_11 = arith.constant 0 : index
    %c0_12 = arith.constant 0 : index
    %25 = vector.load %arg4[%c0_11, %c0_12] : memref<384x128xbf16, #tpu.memory_space<vmem>>, vector<384x128xbf16>
    %cst_13 = arith.constant dense<0.000000e+00> : vector<2x128xf32>
    %26 = tpu.matmul %24, %25, %cst_13 {dimension_numbers = #tpu.dot_dimension_numbers<[1], [0], [0], [1], [0, 0, 1, 1], [], []>} : vector<2x384xbf16>, vector<384x128xbf16>, vector<2x128xf32> -> vector<2x128xf32>
    %27 = vector.broadcast %8 : vector<1x128xf32> to vector<2x128xf32>
    %28 = arith.addf %26, %27 : vector<2x128xf32>
    %cst_14 = arith.constant 0.000000e+00 : f32
    %29 = vector.broadcast %cst_14 : f32 to vector<2x128xf32>
    %30 = arith.maximumf %28, %29 : vector<2x128xf32>
    %31 = vector.extract_strided_slice %30 {offsets = [0, 0], sizes = [1, 128], strides = [1, 1]} : vector<2x128xf32> to vector<1x128xf32>
    %c0_i32 = arith.constant 0 : i32
    %32 = arith.cmpi sgt, %arg1, %c0_i32 : i32
    %33 = arith.extui %32 : i1 to i32
    %34 = arith.sitofp %33 : i32 to f32
    %35 = vector.broadcast %34 : f32 to vector<1x128xf32>
    %36 = arith.mulf %31, %35 : vector<1x128xf32>
    %37 = arith.truncf %36 : vector<1x128xf32> to vector<1x128xbf16>
    %38 = vector.extract_strided_slice %30 {offsets = [1, 0], sizes = [1, 128], strides = [1, 1]} : vector<2x128xf32> to vector<1x128xf32>
    %c3_i32 = arith.constant 3 : i32
    %39 = arith.cmpi slt, %arg1, %c3_i32 : i32
    %40 = arith.extui %39 : i1 to i32
    %41 = arith.sitofp %40 : i32 to f32
    %42 = vector.broadcast %41 : f32 to vector<1x128xf32>
    %43 = arith.mulf %38, %42 : vector<1x128xf32>
    %44 = arith.truncf %43 : vector<1x128xf32> to vector<1x128xbf16>
    %45 = arith.truncf %19 : vector<128x128xf32> to vector<128x128xbf16>
    %46 = vector.extract_strided_slice %45 {offsets = [0, 0], sizes = [127, 128], strides = [1, 1]} : vector<128x128xbf16> to vector<127x128xbf16>
    %47 = tpu.concatenate %37, %46 in 0 : vector<1x128xbf16>, vector<127x128xbf16> -> vector<128x128xbf16>
    %48 = vector.extract_strided_slice %45 {offsets = [1, 0], sizes = [127, 128], strides = [1, 1]} : vector<128x128xbf16> to vector<127x128xbf16>
    %49 = tpu.concatenate %48, %44 in 0 : vector<127x128xbf16>, vector<1x128xbf16> -> vector<128x128xbf16>
    %50 = tpu.concatenate %47, %45, %49, %1 in 1 : vector<128x128xbf16>, vector<128x128xbf16>, vector<128x128xbf16>, vector<128x128xbf16> -> vector<128x512xbf16>
    %c0_15 = arith.constant 0 : index
    %c0_16 = arith.constant 0 : index
    %51 = vector.load %arg6[%c0_15, %c0_16] : memref<512x128xbf16, #tpu.memory_space<vmem>>, vector<512x128xbf16>
    %cst_17 = arith.constant dense<0.000000e+00> : vector<128x128xf32>
    %52 = tpu.matmul %50, %51, %cst_17 {dimension_numbers = #tpu.dot_dimension_numbers<[1], [0], [0], [1], [0, 0, 1, 1], [], []>} : vector<128x512xbf16>, vector<512x128xbf16>, vector<128x128xf32> -> vector<128x128xf32>
    %c0_18 = arith.constant 0 : index
    %c0_19 = arith.constant 0 : index
    %53 = vector.load %arg7[%c0_18, %c0_19] : memref<1x128xf32, #tpu.memory_space<vmem>>, vector<1x128xf32>
    %54 = vector.broadcast %53 : vector<1x128xf32> to vector<128x128xf32>
    %55 = arith.addf %52, %54 : vector<128x128xf32>
    %cst_20 = arith.constant 0.000000e+00 : f32
    %56 = vector.broadcast %cst_20 : f32 to vector<128x128xf32>
    %57 = arith.maximumf %55, %56 : vector<128x128xf32>
    %c0_21 = arith.constant 0 : index
    %c0_22 = arith.constant 0 : index
    %c0_23 = arith.constant 0 : index
    %58 = vector.load %arg8[%c0_21, %c0_22, %c0_23] : memref<1x128x128xf32, #tpu.memory_space<vmem>>, vector<1x128x128xf32>
    %59 = vector.shape_cast %58 : vector<1x128x128xf32> to vector<128x128xf32>
    %60 = vector.shape_cast %57 : vector<128x128xf32> to vector<1x128x128xf32>
    tpu.vector_store %arg8[%c0_21, %c0_22, %c0_23], %60 {strides = array<i32>} : memref<1x128x128xf32, #tpu.memory_space<vmem>>, vector<1x128x128xf32>,
    return
  }
  func.func @transform_0(%arg0: i32, %arg1: i32) -> (i32, i32, i32) {
    %c0_i32 = arith.constant 0 : i32
    %c0_i32_0 = arith.constant 0 : i32
    return %arg0, %arg1, %c0_i32 : i32, i32, i32
  }
  func.func @transform_1(%arg0: i32, %arg1: i32) -> (i32, i32, i32, i32) {
    %c0_i32 = arith.constant 0 : i32
    %c0_i32_0 = arith.constant 0 : i32
    %c0_i32_1 = arith.constant 0 : i32
    return %arg0, %arg1, %c0_i32, %c0_i32_0 : i32, i32, i32, i32
  }
  func.func @transform_2(%arg0: i32, %arg1: i32) -> (i32, i32) {
    %c0_i32 = arith.constant 0 : i32
    %c0_i32_0 = arith.constant 0 : i32
    %c0_i32_1 = arith.constant 0 : i32
    return %c0_i32, %c0_i32_0 : i32, i32
  }
  func.func @transform_3(%arg0: i32, %arg1: i32) -> (i32, i32) {
    %c0_i32 = arith.constant 0 : i32
    %c0_i32_0 = arith.constant 0 : i32
    %c0_i32_1 = arith.constant 0 : i32
    return %c0_i32, %c0_i32_0 : i32, i32
  }
  func.func @transform_4(%arg0: i32, %arg1: i32) -> (i32, i32) {
    %c0_i32 = arith.constant 0 : i32
    %c0_i32_0 = arith.constant 0 : i32
    %c0_i32_1 = arith.constant 0 : i32
    return %c0_i32, %c0_i32_0 : i32, i32
  }
  func.func @transform_5(%arg0: i32, %arg1: i32) -> (i32, i32) {
    %c0_i32 = arith.constant 0 : i32
    %c0_i32_0 = arith.constant 0 : i32
    %c0_i32_1 = arith.constant 0 : i32
    return %c0_i32, %c0_i32_0 : i32, i32
  }
  func.func @transform_6(%arg0: i32, %arg1: i32) -> (i32, i32, i32) {
    %c0_i32 = arith.constant 0 : i32
    %c0_i32_0 = arith.constant 0 : i32
    return %arg0, %arg1, %c0_i32 : i32, i32, i32
  }
}

</mosaic_0001>

<llo_original>
// kernel: residual_block_pallas.1
$region0: #{residual_block_pallas.1}
  #allocation0 [shape = 'u32[]', space=smem, size = 0x4, offset = 0x4, fixed_abs, tag = 'smem constant byte address 0x4 - core index']
  #allocation1 [shape = 'u32[144,128]{1,0:T(1,128)}', space=vmem, size = 0x12000, scoped, tag = 'internal scratch']
  %s0 = inlined_call_operand.vmem [shape: bf16[2,512,128], index: 0, kind: input, shape index: {}]
  %s1 = inlined_call_operand.vmem [shape: bf16[2,4,4,128], index: 1, kind: input, shape index: {}]
  %s2 = inlined_call_operand.vmem [shape: bf16[384,128], index: 2, kind: input, shape index: {}]
  %s3 = inlined_call_operand.vmem [shape: f32[1,128], index: 3, kind: input, shape index: {}]
  %s4 = inlined_call_operand.vmem [shape: bf16[512,128], index: 4, kind: input, shape index: {}]
  %s5 = inlined_call_operand.vmem [shape: f32[1,128], index: 5, kind: input, shape index: {}]
  %s6 = inlined_call_operand.vmem [shape: f32[2,512,128], index: 6, kind: output, shape index: {}]
  %s7 = sld [smem:[#allocation0]]
  $region57: #{residual_block_pallas.1} parent=0
    _
  %s9 = ssub.s32 1, %s7
  %s10 = scalar_select 0, %s9, %s7
  loop: start=0, step=1, limit=10
  $region2: #{residual_block_pallas.1} parent=0 // loop_pre_header
    _
  $region3: #{residual_block_pallas.1} parent=0 // loop_header
    %s12 = sphi 0, %s16
    %p13 = scmp.ge.s32.totalorder %s12, 10
    %s19 = sphi 0, %s31
    %s20 = sphi 0, %s27
    %s21 = sphi 0, %s19
    %s22 = sphi 0, %s20
    %s23 = sphi 0, %s21
    %s24 = sphi 0, %s22
    %s36 = sphi 0, %s38
    %s39 = sphi 0, %s36
    %s40 = sphi 0, %s39
    %s56 = sphi 0, %s40
    %s64 = sphi 0, %s66
    %s67 = sphi 0, %s64
    %s68 = sphi 0, %s67
    %s84 = sphi 0, %s68
    %s88 = sphi 0, %s88
    %s90 = sphi 0, %s88
    %s91 = sphi 0, %s90
    %s105 = sphi 0, %s91
    %s109 = sphi 0, %s109
    %s111 = sphi 0, %s109
    %s112 = sphi 0, %s111
    %s126 = sphi 0, %s112
    %s130 = sphi 0, %s130
    %s132 = sphi 0, %s130
    %s133 = sphi 0, %s132
    %s147 = sphi 0, %s133
    %s151 = sphi 0, %s151
    %s153 = sphi 0, %s151
    %s154 = sphi 0, %s153
    %s168 = sphi 0, %s154
    %s176 = sphi 0, %s178
    %s179 = sphi 0, %s176
    %s180 = sphi 0, %s179
    %s196 = sphi 0, %s180
  $region4: #{residual_block_pallas.1} parent=0 // loop_header_branch
    %15 = sbr.rel (%p13) target = $region8
  $region5: #{residual_block_pallas.1} parent=0 // loop_body
    %s17 = ssub.s32 %s12, 1
    %s18 = ssub.s32 %s12, 2
    %s25 = sadd.s32 1, %s20
    %p26 = scmp.ge.s32.totalorder %s25, 4
    %s27 = scalar_select %p26, 0, %s25
    %s28 = sadd.s32 1, %s19
    %s29 = scalar_select %p26, %s28, %s19
    %p30 = scmp.ge.s32.totalorder %s29, 2
    %s31 = scalar_select %p30, 0, %s29
    %s32 = ssub.s32 %s19, %s31
    %s33 = ssub.s32 %s20, %s27
    %s34 = sor.u32 %s32, %s33
    %p35 = scmp.eq.s32.totalorder %s34, 0
    %s37 = sadd.s32 %s36, 1
    %s38 = scalar_select %p35, %s36, %s37
    %p41 = pneg %p35
    %p42 = scmp.eq.s32.totalorder %s12, 7
    %p43 = por %p41, %p42
    %p44 = scmp.ne.s32.totalorder %s36, %s39
    %p45 = scmp.eq.s32.totalorder %s12, 0
    %p46 = por %p44, %p45
    %p47 = scmp.ne.s32.totalorder %s36, %s39
    %p48 = scmp.eq.s32.totalorder %s17, 7
    %p49 = por %p47, %p48
    %p50 = scmp.ne.s32.totalorder %s39, %s40
    %p51 = scmp.eq.s32.totalorder %s17, 0
    %p52 = por %p50, %p51
    %p53 = scmp.ne.s32.totalorder %s39, %s40
    %p54 = scmp.eq.s32.totalorder %s18, 7
    %p55 = por %p53, %p54
    %p57 = scmp.ne.s32.totalorder %s40, %s56
    %p58 = scmp.eq.s32.totalorder %s18, 0
    %p59 = por %p57, %p58
    %s60 = ssub.s32 %s19, %s31
    %s61 = ssub.s32 %s20, %s27
    %s62 = sor.u32 %s60, %s61
    %p63 = scmp.eq.s32.totalorder %s62, 0
    %s65 = sadd.s32 %s64, 1
    %s66 = scalar_select %p63, %s64, %s65
    %p69 = pneg %p63
    %p70 = scmp.eq.s32.totalorder %s12, 7
    %p71 = por %p69, %p70
    %p72 = scmp.ne.s32.totalorder %s64, %s67
    %p73 = scmp.eq.s32.totalorder %s12, 0
    %p74 = por %p72, %p73
    %p75 = scmp.ne.s32.totalorder %s64, %s67
    %p76 = scmp.eq.s32.totalorder %s17, 7
    %p77 = por %p75, %p76
    %p78 = scmp.ne.s32.totalorder %s67, %s68
    %p79 = scmp.eq.s32.totalorder %s17, 0
    %p80 = por %p78, %p79
    %p81 = scmp.ne.s32.totalorder %s67, %s68
    %p82 = scmp.eq.s32.totalorder %s18, 7
    %p83 = por %p81, %p82
    %p85 = scmp.ne.s32.totalorder %s68, %s84
    %p86 = scmp.eq.s32.totalorder %s18, 0
    %p87 = por %p85, %p86
    %s89 = sadd.s32 %s88, 1
    %p92 = scmp.eq.s32.totalorder %s12, 7
    %p93 = scmp.ne.s32.totalorder %s88, %s90
    %p94 = scmp.eq.s32.totalorder %s12, 0
    %p95 = por %p93, %p94
    %p96 = scmp.ne.s32.totalorder %s88, %s90
    %p97 = scmp.eq.s32.totalorder %s17, 7
    %p98 = por %p96, %p97
    %p99 = scmp.ne.s32.totalorder %s90, %s91
    %p100 = scmp.eq.s32.totalorder %s17, 0
    %p101 = por %p99, %p100
    %p102 = scmp.ne.s32.totalorder %s90, %s91
    %p103 = scmp.eq.s32.totalorder %s18, 7
    %p104 = por %p102, %p103
    %p106 = scmp.ne.s32.totalorder %s91, %s105
    %p107 = scmp.eq.s32.totalorder %s18, 0
    %p108 = por %p106, %p107
    %s110 = sadd.s32 %s109, 1
    %p113 = scmp.eq.s32.totalorder %s12, 7
    %p114 = scmp.ne.s32.totalorder %s109, %s111
    %p115 = scmp.eq.s32.totalorder %s12, 0
    %p116 = por %p114, %p115
    %p117 = scmp.ne.s32.totalorder %s109, %s111
    %p118 = scmp.eq.s32.totalorder %s17, 7
    %p119 = por %p117, %p118
    %p120 = scmp.ne.s32.totalorder %s111, %s112
    %p121 = scmp.eq.s32.totalorder %s17, 0
    %p122 = por %p120, %p121
    %p123 = scmp.ne.s32.totalorder %s111, %s112
    %p124 = scmp.eq.s32.totalorder %s18, 7
    %p125 = por %p123, %p124
    %p127 = scmp.ne.s32.totalorder %s112, %s126
    %p128 = scmp.eq.s32.totalorder %s18, 0
    %p129 = por %p127, %p128
    %s131 = sadd.s32 %s130, 1
    %p134 = scmp.eq.s32.totalorder %s12, 7
    %p135 = scmp.ne.s32.totalorder %s130, %s132
    %p136 = scmp.eq.s32.totalorder %s12, 0
    %p137 = por %p135, %p136
    %p138 = scmp.ne.s32.totalorder %s130, %s132
    %p139 = scmp.eq.s32.totalorder %s17, 7
    %p140 = por %p138, %p139
    %p141 = scmp.ne.s32.totalorder %s132, %s133
    %p142 = scmp.eq.s32.totalorder %s17, 0
    %p143 = por %p141, %p142
    %p144 = scmp.ne.s32.totalorder %s132, %s133
    %p145 = scmp.eq.s32.totalorder %s18, 7
    %p146 = por %p144, %p145
    %p148 = scmp.ne.s32.totalorder %s133, %s147
    %p149 = scmp.eq.s32.totalorder %s18, 0
    %p150 = por %p148, %p149
    %s152 = sadd.s32 %s151, 1
    %p155 = scmp.eq.s32.totalorder %s12, 7
    %p156 = scmp.ne.s32.totalorder %s151, %s153
    %p157 = scmp.eq.s32.totalorder %s12, 0
    %p158 = por %p156, %p157
    %p159 = scmp.ne.s32.totalorder %s151, %s153
    %p160 = scmp.eq.s32.totalorder %s17, 7
    %p161 = por %p159, %p160
    %p162 = scmp.ne.s32.totalorder %s153, %s154
    %p163 = scmp.eq.s32.totalorder %s17, 0
    %p164 = por %p162, %p163
    %p165 = scmp.ne.s32.totalorder %s153, %s154
    %p166 = scmp.eq.s32.totalorder %s18, 7
    %p167 = por %p165, %p166
    %p169 = scmp.ne.s32.totalorder %s154, %s168
    %p170 = scmp.eq.s32.totalorder %s18, 0
    %p171 = por %p169, %p170
    %s172 = ssub.s32 %s19, %s31
    %s173 = ssub.s32 %s20, %s27
    %s174 = sor.u32 %s172, %s173
    %p175 = scmp.eq.s32.totalorder %s174, 0
    %s177 = sadd.s32 %s176, 1
    %s178 = scalar_select %p175, %s176, %s177
    %p181 = pneg %p175
    %p182 = scmp.eq.s32.totalorder %s12, 7
    %p183 = por %p181, %p182
    %p184 = scmp.ne.s32.totalorder %s176, %s179
    %p185 = scmp.eq.s32.totalorder %s12, 0
    %p186 = por %p184, %p185
    %p187 = scmp.ne.s32.totalorder %s176, %s179
    %p188 = scmp.eq.s32.totalorder %s17, 7
    %p189 = por %p187, %p188
    %p190 = scmp.ne.s32.totalorder %s179, %s180
    %p191 = scmp.eq.s32.totalorder %s17, 0
    %p192 = por %p190, %p191
    %p193 = scmp.ne.s32.totalorder %s179, %s180
    %p194 = scmp.eq.s32.totalorder %s18, 7
    %p195 = por %p193, %p194
    %p197 = scmp.ne.s32.totalorder %s180, %s196
    %p198 = scmp.eq.s32.totalorder %s18, 0
    %p199 = por %p197, %p198
    %p200 = scmp.le.s32.totalorder 1, %s12
    %p201 = scmp.lt.s32.totalorder %s12, 9
    %p202 = pnand %p200, %p201
    %p203 = pneg %p202
    // Predicated region
    $region9: #{residual_block_pallas.1} parent=5 // pred_check
      _
    $region10: #{residual_block_pallas.1} parent=5 // pred_check_branch
      %205 = sbr.rel (%p202) target = $region12
    $region11: #{residual_block_pallas.1} parent=5 // pred_region
      %s206 = ssub.s32 %s12, 1
      // Predicated region
      $region13: #{residual_block_pallas.1} parent=11 // pred_check
        %p207 = pneg %p101
      $region14: #{residual_block_pallas.1} parent=11 // pred_check_branch
        %209 = sbr.rel (%p207) target = $region16
      $region15: #{residual_block_pallas.1} parent=11 // pred_region
        _
      $region16: #{residual_block_pallas.1} parent=11 // pred_fallthru
        _
      // Predicated region
      $region17: #{residual_block_pallas.1} parent=11 // pred_check
        %p210 = pneg %p122
      $region18: #{residual_block_pallas.1} parent=11 // pred_check_branch
        %212 = sbr.rel (%p210) target = $region20
      $region19: #{residual_block_pallas.1} parent=11 // pred_region
        _
      $region20: #{residual_block_pallas.1} parent=11 // pred_fallthru
        _
      // Predicated region
      $region21: #{residual_block_pallas.1} parent=11 // pred_check
        %p213 = pneg %p143
      $region22: #{residual_block_pallas.1} parent=11 // pred_check_branch
        %215 = sbr.rel (%p213) target = $region24
      $region23: #{residual_block_pallas.1} parent=11 // pred_region
        _
      $region24: #{residual_block_pallas.1} parent=11 // pred_fallthru
        _
      // Predicated region
      $region25: #{residual_block_pallas.1} parent=11 // pred_check
        %p216 = pneg %p164
      $region26: #{residual_block_pallas.1} parent=11 // pred_check_branch
        %218 = sbr.rel (%p216) target = $region28
      $region27: #{residual_block_pallas.1} parent=11 // pred_region
        _
      $region28: #{residual_block_pallas.1} parent=11 // pred_fallthru
        _
    $region12: #{residual_block_pallas.1} parent=5 // pred_fallthru
      _
    %p219 = scmp.lt.s32.totalorder %s12, 8
    // Predicated region
    $region29: #{residual_block_pallas.1} parent=5 // pred_check
      %p220 = pneg %p219
    $region30: #{residual_block_pallas.1} parent=5 // pred_check_branch
      %222 = sbr.rel (%p220) target = $region32
    $region31: #{residual_block_pallas.1} parent=5 // pred_region
      // Predicated region
      $region33: #{residual_block_pallas.1} parent=31 // pred_check
        %p223 = pneg %p46
      $region34: #{residual_block_pallas.1} parent=31 // pred_check_branch
        %225 = sbr.rel (%p223) target = $region36
      $region35: #{residual_block_pallas.1} parent=31 // pred_region
        %s226 = smul.u32 16, %s20
        %p227 = scmp.lt.s32.totalorder %s19, 1
        %s228 = scalar_select %p227, %s19, 1
        %p229 = scmp.lt.s32.totalorder %s226, 63
        %s230 = scalar_select %p229, %s226, 63
        %s231 = smul.addr %s228, 64
        %s232 = sadd.s32 %s230, %s231
        %s233 = smul.addr %s232, 4
        %s234 = scalar_lea.vmem %s0, %s233
        %s235 = smul.u32 16, %s20
      $region36: #{residual_block_pallas.1} parent=31 // pred_fallthru
        _
      // Predicated region
      $region37: #{residual_block_pallas.1} parent=31 // pred_check
        %p236 = pneg %p74
      $region38: #{residual_block_pallas.1} parent=31 // pred_check_branch
        %238 = sbr.rel (%p236) target = $region40
      $region39: #{residual_block_pallas.1} parent=31 // pred_region
        %p239 = scmp.lt.s32.totalorder %s19, 1
        %s240 = scalar_select %p239, %s19, 1
        %p241 = scmp.lt.s32.totalorder %s20, 3
        %s242 = scalar_select %p241, %s20, 3
        %s243 = smul.addr %s240, 4
        %s244 = sadd.s32 %s242, %s243
        %s245 = smul.addr %s244, 2
        %s246 = scalar_lea.vmem %s1, %s245
      $region40: #{residual_block_pallas.1} parent=31 // pred_fallthru
        _
    $region32: #{residual_block_pallas.1} parent=5 // pred_fallthru
      _
    %p247 = scmp.le.s32.totalorder 1, %s12
    %p248 = scmp.lt.s32.totalorder %s12, 9
    %p249 = pnand %p247, %p248
    %p250 = pneg %p249
    // Predicated region
    $region41: #{residual_block_pallas.1} parent=5 // pred_check
      _
    $region42: #{residual_block_pallas.1} parent=5 // pred_check_branch
      %252 = sbr.rel (%p249) target = $region44
    $region43: #{residual_block_pallas.1} parent=5 // pred_region
      %s253 = ssub.s32 %s12, 1
      %s254 = smul.u32 16, %s22
      %p255 = scmp.lt.s32.totalorder %s21, 1
      %s256 = scalar_select %p255, %s21, 1
      %p257 = scmp.lt.s32.totalorder %s254, 63
      %s258 = scalar_select %p257, %s254, 63
      %s259 = smul.addr %s256, 64
      %s260 = sadd.s32 %s258, %s259
      %s261 = smul.addr %s260, 4
      %s262 = scalar_lea.vmem %s0, %s261
      %p263 = pneg %p52
      %p264 = pneg %p49
      %p265 = scmp.lt.s32.totalorder %s21, 1
      %s266 = scalar_select %p265, %s21, 1
      %p267 = scmp.lt.s32.totalorder %s22, 3
      %s268 = scalar_select %p267, %s22, 3
      %s269 = smul.addr %s266, 4
      %s270 = sadd.s32 %s268, %s269
      %s271 = smul.addr %s270, 2
      %s272 = scalar_lea.vmem %s1, %s271
      %p273 = pneg %p80
      %p274 = pneg %p77
      %p275 = pneg %p101
      %p276 = pneg %p98
      %p277 = pneg %p122
      %p278 = pneg %p119
      %p279 = pneg %p143
      %p280 = pneg %p140
      %p281 = pneg %p164
      %p282 = pneg %p161
      %p283 = pneg %p192
      %p284 = pneg %p189
      %s285 = smul.u32 16, %s22
      %p286 = scmp.lt.s32.totalorder %s21, 1
      %s287 = scalar_select %p286, %s21, 1
      %p288 = scmp.lt.s32.totalorder %s285, 63
      %s289 = scalar_select %p288, %s285, 63
      %s290 = smul.addr %s287, 64
      %s291 = sadd.s32 %s289, %s290
      %s292 = smul.addr %s291, 8
      %s293 = scalar_lea.vmem %s6, %s292
      %s294 = smul.u32 16, %s22
      %p295 = scmp.lt.s32.totalorder %s21, 1
      %s296 = scalar_select %p295, %s21, 1
      %p297 = scmp.lt.s32.totalorder %s294, 63
      %s298 = scalar_select %p297, %s294, 63
      %s299 = smul.addr %s296, 64
      %s300 = sadd.s32 %s298, %s299
      %s301 = smul.addr %s300, 4
      %s302 = scalar_lea.vmem %s0, %s301
      %s303 = smul.u32 16, %s22
      %p304 = scmp.lt.s32.totalorder %s21, 1
      %s305 = scalar_select %p304, %s21, 1
      %p306 = scmp.lt.s32.totalorder %s22, 3
      %s307 = scalar_select %p306, %s22, 3
      %s308 = smul.addr %s305, 4
      %s309 = sadd.s32 %s307, %s308
      %s310 = smul.addr %s309, 2
      %s311 = scalar_lea.vmem %s1, %s310
      %s312 = smul.u32 16, %s22
      %p313 = scmp.lt.s32.totalorder %s21, 1
      %s314 = scalar_select %p313, %s21, 1
      %p315 = scmp.lt.s32.totalorder %s312, 63
      %s316 = scalar_select %p315, %s312, 63
      %s317 = smul.addr %s314, 64
      %s318 = sadd.s32 %s316, %s317
      %s319 = smul.addr %s318, 8
      %s320 = scalar_lea.vmem %s6, %s319
      %s321 = smul.u32 16, %s22
      %v323 = vld [vmem:[%s302] sm:$0xf]
      %v324 = vld [vmem:[%s302 + $0x4] sm:$0xf]
      %v325 = vld [vmem:[%s302 + $0x8] sm:$0xf]
      %v326 = vld [vmem:[%s302 + $0xc] sm:$0xf]
      %v327 = vld [vmem:[%s302 + $0x10] sm:$0xf]
      %v328 = vld [vmem:[%s302 + $0x14] sm:$0xf]
      %v329 = vld [vmem:[%s302 + $0x18] sm:$0xf]
      %v330 = vld [vmem:[%s302 + $0x1c] sm:$0xf]
      %v331 = vld [vmem:[%s302 + $0x20] sm:$0xf]
      %v332 = vld [vmem:[%s302 + $0x24] sm:$0xf]
      %v333 = vld [vmem:[%s302 + $0x28] sm:$0xf]
      %v334 = vld [vmem:[%s302 + $0x2c] sm:$0xf]
      %v335 = vld [vmem:[%s302 + $0x30] sm:$0xf]
      %v336 = vld [vmem:[%s302 + $0x34] sm:$0xf]
      %v337 = vld [vmem:[%s302 + $0x38] sm:$0xf]
      %v338 = vld [vmem:[%s302 + $0x3c] sm:$0xf]
      %v339 = vld [vmem:[%s311] sm:$0x3]
      %v340 = vld [vmem:[%s3] sm:$0x1]
      %v343 = vunpack.c.l.s4 1983009808
      %v344 = vunpack.c.0.s8 %v343
      %v345 = vlaneseq
      %v346 = vshrl.u32 %v345, 7
      %v347 = vsub.s32 %v344, %v346
      %v348 = vrot.slane %v339, %v347
      %v350 = vshrl.u32 %v348, 16
      %v369 = vunpack.c.l.b16 %v323
      %v370 = vunpack.c.l.b16 %v324
      %v371 = vunpack.c.l.b16 %v325
      %v372 = vunpack.c.l.b16 %v326
      %v373 = vunpack.c.l.b16 %v327
      %v374 = vunpack.c.l.b16 %v328
      %v375 = vunpack.c.l.b16 %v329
      %v376 = vunpack.c.l.b16 %v330
      %v377 = vunpack.c.l.b16 %v331
      %v378 = vunpack.c.l.b16 %v332
      %v379 = vunpack.c.l.b16 %v333
      %v380 = vunpack.c.l.b16 %v334
      %v381 = vunpack.c.l.b16 %v335
      %v382 = vunpack.c.l.b16 %v336
      %v383 = vunpack.c.l.b16 %v337
      %v384 = vunpack.c.l.b16 %v338
      %v385 = vpack.c.b16 %v370, %v369
      %v386 = vpack.c.b16 %v372, %v371
      %v387 = vpack.c.b16 %v374, %v373
      %v388 = vpack.c.b16 %v376, %v375
      %v389 = vpack.c.b16 %v378, %v377
      %v390 = vpack.c.b16 %v380, %v379
      %v391 = vpack.c.b16 %v382, %v381
      %v392 = vpack.c.b16 %v384, %v383
      %vm393 = vsmask.f32 256
      %v395 = vshrl.u32 %v385, 16
      %v397 = vrot.slane %v395, 7
      %v398 = vshll.u32 %v385, 16
      %v400 = vor.u32 %v397, %v398
      %v402 = vshrl.u32 %v386, 16
      %v404 = vrot.slane %v402, 7
      %v405 = vshll.u32 %v386, 16
      %v407 = vor.u32 %v404, %v405
      %v408 = vsel %vm393, %v397, %v407
      %v410 = vshrl.u32 %v387, 16
      %v412 = vrot.slane %v410, 7
      %v413 = vshll.u32 %v387, 16
      %v415 = vor.u32 %v412, %v413
      %v416 = vsel %vm393, %v404, %v415
      %v418 = vshrl.u32 %v388, 16
      %v420 = vrot.slane %v418, 7
      %v421 = vshll.u32 %v388, 16
      %v423 = vor.u32 %v420, %v421
      %v424 = vsel %vm393, %v412, %v423
      %v426 = vshrl.u32 %v389, 16
      %v428 = vrot.slane %v426, 7
      %v429 = vshll.u32 %v389, 16
      %v431 = vor.u32 %v428, %v429
      %v432 = vsel %vm393, %v420, %v431
      %v434 = vshrl.u32 %v390, 16
      %v436 = vrot.slane %v434, 7
      %v437 = vshll.u32 %v390, 16
      %v439 = vor.u32 %v436, %v437
      %v440 = vsel %vm393, %v428, %v439
      %v442 = vshrl.u32 %v391, 16
      %v444 = vrot.slane %v442, 7
      %v445 = vshll.u32 %v391, 16
      %v447 = vor.u32 %v444, %v445
      %v448 = vsel %vm393, %v436, %v447
      %v450 = vshrl.u32 %v392, 16
      %v452 = vrot.slane %v450, 7
      %v453 = vshll.u32 %v392, 16
      %v455 = vor.u32 %v452, %v453
      %v456 = vsel %vm393, %v444, %v455
      %vm465 = vcmask 1040384
      %vm466 = vmand %vm465, %vm393
      %v467 = vsel %vm466, %v350, %v400
      %vm468 = vsmask.f32 7424
      %v469 = vrot.slane %v398, 1
      %v470 = vor.u32 %v395, %v469
      %v471 = vrot.slane %v405, 1
      %v472 = vsel %vm468, %v470, %v471
      %v473 = vor.u32 %v402, %v471
      %v474 = vrot.slane %v413, 1
      %v475 = vsel %vm468, %v473, %v474
      %v476 = vor.u32 %v410, %v474
      %v477 = vrot.slane %v421, 1
      %v478 = vsel %vm468, %v476, %v477
      %v479 = vor.u32 %v418, %v477
      %v480 = vrot.slane %v429, 1
      %v481 = vsel %vm468, %v479, %v480
      %v482 = vor.u32 %v426, %v480
      %v483 = vrot.slane %v437, 1
      %v484 = vsel %vm468, %v482, %v483
      %v485 = vor.u32 %v434, %v483
      %v486 = vrot.slane %v445, 1
      %v487 = vsel %vm468, %v485, %v486
      %v488 = vor.u32 %v442, %v486
      %v489 = vrot.slane %v453, 1
      %v490 = vsel %vm468, %v488, %v489
      %v491 = vor.u32 %v450, %v489
      %v500 = vshll.u32 %v348, 16
      %v502 = vrot.slane %v500, 2
      %vm504 = vcmask 1047552
      %vm505 = vmand %vm504, %vm468
      %v506 = vsel %vm505, %v491, %v502
      %v515 = vld [vmem:[%s2] sm:$0xf]
      %v516 = vld [vmem:[%s2 + $0x4] sm:$0xf]
      %v517 = vld [vmem:[%s2 + $0x8] sm:$0xf]
      %v518 = vld [vmem:[%s2 + $0xc] sm:$0xf]
      %v519 = vld [vmem:[%s2 + $0x10] sm:$0xf]
      %v520 = vld [vmem:[%s2 + $0x14] sm:$0xf]
      %v521 = vld [vmem:[%s2 + $0x18] sm:$0xf]
      %v522 = vld [vmem:[%s2 + $0x1c] sm:$0xf]
      %v523 = vld [vmem:[%s2 + $0x20] sm:$0xf]
      %v524 = vld [vmem:[%s2 + $0x24] sm:$0xf]
      %v525 = vld [vmem:[%s2 + $0x28] sm:$0xf]
      %v526 = vld [vmem:[%s2 + $0x2c] sm:$0xf]
      %v527 = vld [vmem:[%s2 + $0x30] sm:$0xf]
      %v528 = vld [vmem:[%s2 + $0x34] sm:$0xf]
      %v529 = vld [vmem:[%s2 + $0x38] sm:$0xf]
      %v530 = vld [vmem:[%s2 + $0x3c] sm:$0xf]
      %v531 = vld [vmem:[%s2 + $0x40] sm:$0xf]
      %v532 = vld [vmem:[%s2 + $0x44] sm:$0xf]
      %v533 = vld [vmem:[%s2 + $0x48] sm:$0xf]
      %v534 = vld [vmem:[%s2 + $0x4c] sm:$0xf]
      %v535 = vld [vmem:[%s2 + $0x50] sm:$0xf]
      %v536 = vld [vmem:[%s2 + $0x54] sm:$0xf]
      %v537 = vld [vmem:[%s2 + $0x58] sm:$0xf]
      %v538 = vld [vmem:[%s2 + $0x5c] sm:$0xf]
      %v539 = vld [vmem:[%s2 + $0x60] sm:$0xf]
      %v540 = vld [vmem:[%s2 + $0x64] sm:$0xf]
      %v541 = vld [vmem:[%s2 + $0x68] sm:$0xf]
      %v542 = vld [vmem:[%s2 + $0x6c] sm:$0xf]
      %v543 = vld [vmem:[%s2 + $0x70] sm:$0xf]
      %v544 = vld [vmem:[%s2 + $0x74] sm:$0xf]
      %v545 = vld [vmem:[%s2 + $0x78] sm:$0xf]
      %v546 = vld [vmem:[%s2 + $0x7c] sm:$0xf]
      %v547 = vld [vmem:[%s2 + $0x80] sm:$0xf]
      %v548 = vld [vmem:[%s2 + $0x84] sm:$0xf]
      %v549 = vld [vmem:[%s2 + $0x88] sm:$0xf]
      %v550 = vld [vmem:[%s2 + $0x8c] sm:$0xf]
      %v551 = vld [vmem:[%s2 + $0x90] sm:$0xf]
      %v552 = vld [vmem:[%s2 + $0x94] sm:$0xf]
      %v553 = vld [vmem:[%s2 + $0x98] sm:$0xf]
      %v554 = vld [vmem:[%s2 + $0x9c] sm:$0xf]
      %v555 = vld [vmem:[%s2 + $0xa0] sm:$0xf]
      %v556 = vld [vmem:[%s2 + $0xa4] sm:$0xf]
      %v557 = vld [vmem:[%s2 + $0xa8] sm:$0xf]
      %v558 = vld [vmem:[%s2 + $0xac] sm:$0xf]
      %v559 = vld [vmem:[%s2 + $0xb0] sm:$0xf]
      %v560 = vld [vmem:[%s2 + $0xb4] sm:$0xf]
      %v561 = vld [vmem:[%s2 + $0xb8] sm:$0xf]
      %v562 = vld [vmem:[%s2 + $0xbc] sm:$0xf]
      %v564 = vlaneseq
      %v565 = vshrl.u32 %v564, 7
      %v566 = vsub.s32 0, %v565
      %v567 = vrot.slane %v340, %v566
      %v617 = vunpack.c.l.b16 %v515
      %v618 = vunpack.c.l.b16 %v516
      %v619 = vunpack.c.l.b16 %v517
      %v620 = vunpack.c.l.b16 %v518
      %v621 = vunpack.c.l.b16 %v519
      %v622 = vunpack.c.l.b16 %v520
      %v623 = vunpack.c.l.b16 %v521
      %v624 = vunpack.c.l.b16 %v522
      %v625 = vunpack.c.l.b16 %v523
      %v626 = vunpack.c.l.b16 %v524
      %v627 = vunpack.c.l.b16 %v525
      %v628 = vunpack.c.l.b16 %v526
      %v629 = vunpack.c.l.b16 %v527
      %v630 = vunpack.c.l.b16 %v528
      %v631 = vunpack.c.l.b16 %v529
      %v632 = vunpack.c.l.b16 %v530
      %v633 = vunpack.c.l.b16 %v531
      %v634 = vunpack.c.l.b16 %v532
      %v635 = vunpack.c.l.b16 %v533
      %v636 = vunpack.c.l.b16 %v534
      %v637 = vunpack.c.l.b16 %v535
      %v638 = vunpack.c.l.b16 %v536
      %v639 = vunpack.c.l.b16 %v537
      %v640 = vunpack.c.l.b16 %v538
      %v641 = vunpack.c.l.b16 %v539
      %v642 = vunpack.c.l.b16 %v540
      %v643 = vunpack.c.l.b16 %v541
      %v644 = vunpack.c.l.b16 %v542
      %v645 = vunpack.c.l.b16 %v543
      %v646 = vunpack.c.l.b16 %v544
      %v647 = vunpack.c.l.b16 %v545
      %v648 = vunpack.c.l.b16 %v546
      %v649 = vunpack.c.l.b16 %v547
      %v650 = vunpack.c.l.b16 %v548
      %v651 = vunpack.c.l.b16 %v549
      %v652 = vunpack.c.l.b16 %v550
      %v653 = vunpack.c.l.b16 %v551
      %v654 = vunpack.c.l.b16 %v552
      %v655 = vunpack.c.l.b16 %v553
      %v656 = vunpack.c.l.b16 %v554
      %v657 = vunpack.c.l.b16 %v555
      %v658 = vunpack.c.l.b16 %v556
      %v659 = vunpack.c.l.b16 %v557
      %v660 = vunpack.c.l.b16 %v558
      %v661 = vunpack.c.l.b16 %v559
      %v662 = vunpack.c.l.b16 %v560
      %v663 = vunpack.c.l.b16 %v561
      %v664 = vunpack.c.l.b16 %v562
      %v665 = vpack.c.b16 %v618, %v617
      %v666 = vpack.c.b16 %v620, %v619
      %v667 = vpack.c.b16 %v622, %v621
      %v668 = vpack.c.b16 %v624, %v623
      %v669 = vpack.c.b16 %v626, %v625
      %v670 = vpack.c.b16 %v628, %v627
      %v671 = vpack.c.b16 %v630, %v629
      %v672 = vpack.c.b16 %v632, %v631
      %v673 = vpack.c.b16 %v634, %v633
      %v674 = vpack.c.b16 %v636, %v635
      %v675 = vpack.c.b16 %v638, %v637
      %v676 = vpack.c.b16 %v640, %v639
      %v677 = vpack.c.b16 %v642, %v641
      %v678 = vpack.c.b16 %v644, %v643
      %v679 = vpack.c.b16 %v646, %v645
      %v680 = vpack.c.b16 %v648, %v647
      %v681 = vpack.c.b16 %v650, %v649
      %v682 = vpack.c.b16 %v652, %v651
      %v683 = vpack.c.b16 %v654, %v653
      %v684 = vpack.c.b16 %v656, %v655
      %v685 = vpack.c.b16 %v658, %v657
      %v686 = vpack.c.b16 %v660, %v659
      %v687 = vpack.c.b16 %v662, %v661
      %v688 = vpack.c.b16 %v664, %v663
      %713 = vmatprep.subr.bf16.mxu0 0
      %714 = vmatpush1.bf16.msra.mxu0 %v665
      %715 = vmatprep.subr.bf16.mxu0 0
      %716 = vmatpush1.bf16.msra.mxu0 %v666
      %717 = vmatprep.subr.bf16.mxu0 0
      %718 = vmatpush1.bf16.msra.mxu0 %v667
      %719 = vmatprep.subr.bf16.mxu0 0
      %720 = vmatpush1.bf16.msra.mxu0 %v668
      %721 = vmatprep.subr.bf16.mxu0 0
      %722 = vmatpush1.bf16.msra.mxu0 %v669
      %723 = vmatprep.subr.bf16.mxu0 0
      %724 = vmatpush1.bf16.msra.mxu0 %v670
      %725 = vmatprep.subr.bf16.mxu0 0
      %726 = vmatpush1.bf16.msra.mxu0 %v671
      %727 = vmatprep.subr.bf16.mxu0 0
      %728 = vmatpush1.bf16.msra.mxu0 %v672
      %729 = vmatprep.subr.bf16.mxu0 0
      %730 = vmatpush1.bf16.msra.mxu0 %v673
      %731 = vmatprep.subr.bf16.mxu0 0
      %732 = vmatpush1.bf16.msra.mxu0 %v674
      %733 = vmatprep.subr.bf16.mxu0 0
      %734 = vmatpush1.bf16.msra.mxu0 %v675
      %735 = vmatprep.subr.bf16.mxu0 0
      %736 = vmatpush1.bf16.msra.mxu0 %v676
      %737 = vmatprep.subr.bf16.mxu0 0
      %738 = vmatpush1.bf16.msra.mxu0 %v677
      %739 = vmatprep.subr.bf16.mxu0 0
      %740 = vmatpush1.bf16.msra.mxu0 %v678
      %741 = vmatprep.subr.bf16.mxu0 0
      %742 = vmatpush1.bf16.msra.mxu0 %v679
      %743 = vmatprep.subr.bf16.mxu0 0
      %744 = vmatpush1.bf16.msra.mxu0 %v680
      %745 = vmatprep.mubr.bf16.mxu0 %v385
      %746 = vmatmul.mubr.bf16.gmra.mrb[0].mxu0 %v467
      %v747 = vpop.f32.mrb[0].mxu0
      %v748 = vadd.f32 %v567, %v747
      %v749 = vpop.f32.mrb[0].mxu0
      %v750 = vpop.f32.mrb[0].mxu0
      %v751 = vadd.f32 %v567, %v750
      %v752 = vpop.f32.mrb[0].mxu0
      %753 = vmatprep.mubr.bf16.mxu0 %v386
      %754 = vmatmul.mubr.bf16.gmra.mrb[0].mxu0 %v408
      %v755 = vpop.f32.mrb[0].mxu0
      %v756 = vadd.f32 %v567, %v755
      %v757 = vpop.f32.mrb[0].mxu0
      %v758 = vpop.f32.mrb[0].mxu0
      %v759 = vadd.f32 %v567, %v758
      %v760 = vpop.f32.mrb[0].mxu0
      %761 = vmatprep.mubr.bf16.mxu0 %v387
      %762 = vmatmul.mubr.bf16.gmra.mrb[0].mxu0 %v416
      %v763 = vpop.f32.mrb[0].mxu0
      %v764 = vadd.f32 %v567, %v763
      %v765 = vpop.f32.mrb[0].mxu0
      %v766 = vpop.f32.mrb[0].mxu0
      %v767 = vadd.f32 %v567, %v766
      %v768 = vpop.f32.mrb[0].mxu0
      %769 = vmatprep.mubr.bf16.mxu0 %v388
      %770 = vmatmul.mubr.bf16.gmra.mrb[0].mxu0 %v424
      %v771 = vpop.f32.mrb[0].mxu0
      %v772 = vadd.f32 %v567, %v771
      %v773 = vpop.f32.mrb[0].mxu0
      %v774 = vpop.f32.mrb[0].mxu0
      %v775 = vadd.f32 %v567, %v774
      %v776 = vpop.f32.mrb[0].mxu0
      %777 = vmatprep.mubr.bf16.mxu0 %v389
      %778 = vmatmul.mubr.bf16.gmra.mrb[0].mxu0 %v432
      %v779 = vpop.f32.mrb[0].mxu0
      %v780 = vadd.f32 %v567, %v779
      %v781 = vpop.f32.mrb[0].mxu0
      %v782 = vpop.f32.mrb[0].mxu0
      %v783 = vadd.f32 %v567, %v782
      %v784 = vpop.f32.mrb[0].mxu0
      %785 = vmatprep.mubr.bf16.mxu0 %v390
      %786 = vmatmul.mubr.bf16.gmra.mrb[0].mxu0 %v440
      %v787 = vpop.f32.mrb[0].mxu0
      %v788 = vadd.f32 %v567, %v787
      %v789 = vpop.f32.mrb[0].mxu0
      %v790 = vpop.f32.mrb[0].mxu0
      %v791 = vadd.f32 %v567, %v790
      %v792 = vpop.f32.mrb[0].mxu0
      %793 = vmatprep.mubr.bf16.mxu0 %v391
      %794 = vmatmul.mubr.bf16.gmra.mrb[0].mxu0 %v448
      %v795 = vpop.f32.mrb[0].mxu0
      %v796 = vadd.f32 %v567, %v795
      %v797 = vpop.f32.mrb[0].mxu0
      %v798 = vpop.f32.mrb[0].mxu0
      %v799 = vadd.f32 %v567, %v798
      %v800 = vpop.f32.mrb[0].mxu0
      %801 = vmatprep.mubr.bf16.mxu0 %v392
      %802 = vmatmul.mubr.bf16.gmra.mrb[0].mxu0 %v456
      %v803 = vpop.f32.mrb[0].mxu0
      %v804 = vadd.f32 %v567, %v803
      %v805 = vpop.f32.mrb[0].mxu0
      %v806 = vpop.f32.mrb[0].mxu0
      %v807 = vadd.f32 %v567, %v806
      %v808 = vpop.f32.mrb[0].mxu0
      %809 = vdwg.mxu0
      %810 = vmatprep.subr.bf16.mxu0 0
      %811 = vmatpush1.bf16.msra.mxu0 %v681
      %812 = vmatprep.subr.bf16.mxu0 0
      %813 = vmatpush1.bf16.msra.mxu0 %v682
      %814 = vmatprep.subr.bf16.mxu0 0
      %815 = vmatpush1.bf16.msra.mxu0 %v683
      %816 = vmatprep.subr.bf16.mxu0 0
      %817 = vmatpush1.bf16.msra.mxu0 %v684
      %818 = vmatprep.subr.bf16.mxu0 0
      %819 = vmatpush1.bf16.msra.mxu0 %v685
      %820 = vmatprep.subr.bf16.mxu0 0
      %821 = vmatpush1.bf16.msra.mxu0 %v686
      %822 = vmatprep.subr.bf16.mxu0 0
      %823 = vmatpush1.bf16.msra.mxu0 %v687
      %824 = vmatprep.subr.bf16.mxu0 0
      %825 = vmatpush1.bf16.msra.mxu0 %v688
      %826 = vmatprep.subr.bf16.mxu0 0
      %827 = vmatpush1.bf16.msra.mxu0 0
      %828 = vmatprep.subr.bf16.mxu0 0
      %829 = vmatpush1.bf16.msra.mxu0 0
      %830 = vmatprep.subr.bf16.mxu0 0
      %831 = vmatpush1.bf16.msra.mxu0 0
      %832 = vmatprep.subr.bf16.mxu0 0
      %833 = vmatpush1.bf16.msra.mxu0 0
      %834 = vmatprep.subr.bf16.mxu0 0
      %835 = vmatpush1.bf16.msra.mxu0 0
      %836 = vmatprep.subr.bf16.mxu0 0
      %837 = vmatpush1.bf16.msra.mxu0 0
      %838 = vmatprep.subr.bf16.mxu0 0
      %839 = vmatpush1.bf16.msra.mxu0 0
      %840 = vmatprep.subr.bf16.mxu0 0
      %841 = vmatpush1.bf16.msra.mxu0 0
      %842 = vmatprep.mubr.bf16.mxu0 0
      %843 = vmatmul.mubr.bf16.gmra.mrb[0].mxu0 %v472
      %v844 = vpop.f32.mrb[0].mxu0
      %v845 = vadd.f32 %v748, %v844
      %v846 = vpop.f32.mrb[0].mxu0
      %v847 = vpop.f32.mrb[0].mxu0
      %v848 = vadd.f32 %v751, %v847
      %v849 = vpop.f32.mrb[0].mxu0
      %850 = vmatprep.mubr.bf16.mxu0 0
      %851 = vmatmul.mubr.bf16.gmra.mrb[0].mxu0 %v475
      %v852 = vpop.f32.mrb[0].mxu0
      %v853 = vadd.f32 %v756, %v852
      %v854 = vpop.f32.mrb[0].mxu0
      %v855 = vpop.f32.mrb[0].mxu0
      %v856 = vadd.f32 %v759, %v855
      %v857 = vpop.f32.mrb[0].mxu0
      %858 = vmatprep.mubr.bf16.mxu0 0
      %859 = vmatmul.mubr.bf16.gmra.mrb[0].mxu0 %v478
      %v860 = vpop.f32.mrb[0].mxu0
      %v861 = vadd.f32 %v764, %v860
      %v862 = vpop.f32.mrb[0].mxu0
      %v863 = vpop.f32.mrb[0].mxu0
      %v864 = vadd.f32 %v767, %v863
      %v865 = vpop.f32.mrb[0].mxu0
      %866 = vmatprep.mubr.bf16.mxu0 0
      %867 = vmatmul.mubr.bf16.gmra.mrb[0].mxu0 %v481
      %v868 = vpop.f32.mrb[0].mxu0
      %v869 = vadd.f32 %v772, %v868
      %v870 = vpop.f32.mrb[0].mxu0
      %v871 = vpop.f32.mrb[0].mxu0
      %v872 = vadd.f32 %v775, %v871
      %v873 = vpop.f32.mrb[0].mxu0
      %874 = vmatprep.mubr.bf16.mxu0 0
      %875 = vmatmul.mubr.bf16.gmra.mrb[0].mxu0 %v484
      %v876 = vpop.f32.mrb[0].mxu0
      %v877 = vadd.f32 %v780, %v876
      %v878 = vpop.f32.mrb[0].mxu0
      %v879 = vpop.f32.mrb[0].mxu0
      %v880 = vadd.f32 %v783, %v879
      %v881 = vpop.f32.mrb[0].mxu0
      %882 = vmatprep.mubr.bf16.mxu0 0
      %883 = vmatmul.mubr.bf16.gmra.mrb[0].mxu0 %v487
      %v884 = vpop.f32.mrb[0].mxu0
      %v885 = vadd.f32 %v788, %v884
      %v886 = vpop.f32.mrb[0].mxu0
      %v887 = vpop.f32.mrb[0].mxu0
      %v888 = vadd.f32 %v791, %v887
      %v889 = vpop.f32.mrb[0].mxu0
      %890 = vmatprep.mubr.bf16.mxu0 0
      %891 = vmatmul.mubr.bf16.gmra.mrb[0].mxu0 %v490
      %v892 = vpop.f32.mrb[0].mxu0
      %v893 = vadd.f32 %v796, %v892
      %v894 = vpop.f32.mrb[0].mxu0
      %v895 = vpop.f32.mrb[0].mxu0
      %v896 = vadd.f32 %v799, %v895
      %v897 = vpop.f32.mrb[0].mxu0
      %898 = vmatprep.mubr.bf16.mxu0 0
      %899 = vmatmul.mubr.bf16.gmra.mrb[0].mxu0 %v506
      %v900 = vpop.f32.mrb[0].mxu0
      %v901 = vadd.f32 %v804, %v900
      %v902 = vpop.f32.mrb[0].mxu0
      %v903 = vpop.f32.mrb[0].mxu0
      %v904 = vadd.f32 %v807, %v903
      %v905 = vpop.f32.mrb[0].mxu0
      %906 = vdwg.mxu0
      %v907 = vmax.f32 %v845, 0.0
      %v908 = vmax.f32 %v848, 0.0
      %v909 = vmax.f32 %v853, 0.0
      %v910 = vmax.f32 %v856, 0.0
      %v911 = vmax.f32 %v861, 0.0
      %v912 = vmax.f32 %v864, 0.0
      %v913 = vmax.f32 %v869, 0.0
      %v914 = vmax.f32 %v872, 0.0
      %v915 = vmax.f32 %v877, 0.0
      %v916 = vmax.f32 %v880, 0.0
      %v917 = vmax.f32 %v885, 0.0
      %v918 = vmax.f32 %v888, 0.0
      %v919 = vmax.f32 %v893, 0.0
      %v920 = vmax.f32 %v896, 0.0
      %v921 = vmax.f32 %v901, 0.0
      %v922 = vmax.f32 %v904, 0.0
      %v923 = vrot.slane %v500, 6
      %v924 = vcombine.low %v339, %v339
      %v926 = vunpack.c.l.s4 1983009808
      %v927 = vunpack.c.0.s8 %v926
      %v928 = vlaneseq
      %v929 = vshrl.u32 %v928, 7
      %v930 = vsub.s32 %v927, %v929
      %v931 = vrot.slane %v924, %v930
      %v932 = vrot.slane %v338, 3
      %v933 = vrot.slane %v923, 3
      %v934 = vrot.slane %v931, 3
      %v938 = vsel %vm466, %v339, %v932
      %v939 = vsel %vm466, %v350, %v933
      %v940 = vsel %vm466, %v323, %v934
      %941 = vmatprep.subr.bf16.mxu0 0
      %942 = vmatpush1.bf16.msra.mxu0 %v665
      %943 = vmatprep.subr.bf16.mxu0 0
      %944 = vmatpush1.bf16.msra.mxu0 %v666
      %945 = vmatprep.subr.bf16.mxu0 0
      %946 = vmatpush1.bf16.msra.mxu0 %v667
      %947 = vmatprep.subr.bf16.mxu0 0
      %948 = vmatpush1.bf16.msra.mxu0 %v668
      %949 = vmatprep.subr.bf16.mxu0 0
      %950 = vmatpush1.bf16.msra.mxu0 %v669
      %951 = vmatprep.subr.bf16.mxu0 0
      %952 = vmatpush1.bf16.msra.mxu0 %v670
      %953 = vmatprep.subr.bf16.mxu0 0
      %954 = vmatpush1.bf16.msra.mxu0 %v671
      %955 = vmatprep.subr.bf16.mxu0 0
      %956 = vmatpush1.bf16.msra.mxu0 %v672
      %957 = vmatprep.subr.bf16.mxu0 0
      %958 = vmatpush1.bf16.msra.mxu0 %v673
      %959 = vmatprep.subr.bf16.mxu0 0
      %960 = vmatpush1.bf16.msra.mxu0 %v674
      %961 = vmatprep.subr.bf16.mxu0 0
      %962 = vmatpush1.bf16.msra.mxu0 %v675
      %963 = vmatprep.subr.bf16.mxu0 0
      %964 = vmatpush1.bf16.msra.mxu0 %v676
      %965 = vmatprep.subr.bf16.mxu0 0
      %966 = vmatpush1.bf16.msra.mxu0 %v677
      %967 = vmatprep.subr.bf16.mxu0 0
      %968 = vmatpush1.bf16.msra.mxu0 %v678
      %969 = vmatprep.subr.bf16.mxu0 0
      %970 = vmatpush1.bf16.msra.mxu0 %v679
      %971 = vmatprep.subr.bf16.mxu0 0
      %972 = vmatpush1.bf16.msra.mxu0 %v680
      %973 = vmatprep.mubr.bf16.mxu0 %v939
      %974 = vmatmul.mubr.bf16.gmra.mrb[0].mxu0 %v938
      %v975 = vpop.f32.mrb[0].mxu0
      %v976 = vadd.f32 %v567, %v975
      %v977 = vpop.f32.mrb[0].mxu0
      %v978 = vpop.f32.mrb[0].mxu0
      %v979 = vpop.f32.mrb[0].mxu0
      %980 = vdwg.mxu0
      %981 = vmatprep.subr.bf16.mxu0 0
      %982 = vmatpush1.bf16.msra.mxu0 %v681
      %983 = vmatprep.subr.bf16.mxu0 0
      %984 = vmatpush1.bf16.msra.mxu0 %v682
      %985 = vmatprep.subr.bf16.mxu0 0
      %986 = vmatpush1.bf16.msra.mxu0 %v683
      %987 = vmatprep.subr.bf16.mxu0 0
      %988 = vmatpush1.bf16.msra.mxu0 %v684
      %989 = vmatprep.subr.bf16.mxu0 0
      %990 = vmatpush1.bf16.msra.mxu0 %v685
      %991 = vmatprep.subr.bf16.mxu0 0
      %992 = vmatpush1.bf16.msra.mxu0 %v686
      %993 = vmatprep.subr.bf16.mxu0 0
      %994 = vmatpush1.bf16.msra.mxu0 %v687
      %995 = vmatprep.subr.bf16.mxu0 0
      %996 = vmatpush1.bf16.msra.mxu0 %v688
      %997 = vmatprep.subr.bf16.mxu0 0
      %998 = vmatpush1.bf16.msra.mxu0 0
      %999 = vmatprep.subr.bf16.mxu0 0
      %1000 = vmatpush1.bf16.msra.mxu0 0
      %1001 = vmatprep.subr.bf16.mxu0 0
      %1002 = vmatpush1.bf16.msra.mxu0 0
      %1003 = vmatprep.subr.bf16.mxu0 0
      %1004 = vmatpush1.bf16.msra.mxu0 0
      %1005 = vmatprep.subr.bf16.mxu0 0
      %1006 = vmatpush1.bf16.msra.mxu0 0
      %1007 = vmatprep.subr.bf16.mxu0 0
      %1008 = vmatpush1.bf16.msra.mxu0 0
      %1009 = vmatprep.subr.bf16.mxu0 0
      %1010 = vmatpush1.bf16.msra.mxu0 0
      %1011 = vmatprep.subr.bf16.mxu0 0
      %1012 = vmatpush1.bf16.msra.mxu0 0
      %1013 = vmatprep.mubr.bf16.mxu0 0
      %1014 = vmatmul.mubr.bf16.gmra.mrb[0].mxu0 %v940
      %v1015 = vpop.f32.mrb[0].mxu0
      %v1016 = vadd.f32 %v976, %v1015
      %v1017 = vpop.f32.mrb[0].mxu0
      %v1018 = vpop.f32.mrb[0].mxu0
      %v1019 = vpop.f32.mrb[0].mxu0
      %1020 = vdwg.mxu0
      %v1021 = vmax.f32 %v1016, 0.0
      %p1022 = scmp.gt.s32.totalorder %s22, 0
      %s1023 = scalar_select %p1022, 1, 0
      %s1024 = scvt.s32.f32 %s1023
      %v1025 = vstv %s1024
      %v1026 = vmul.f32 %v1021, %v1025
      %v1027 = vpack.c.bf16 %v1026, %v1026
      %p1028 = scmp.lt.s32.totalorder %s22, 3
      %s1029 = scalar_select %p1028, 1, 0
      %s1030 = scvt.s32.f32 %s1029
      %v1031 = vstv %s1030
      %v1032 = vmul.f32 %v1021, %v1031
      %v1033 = vpack.c.bf16 %v1032, %v1032
      %v1034 = vpack.c.bf16 %v908, %v907
      %v1035 = vpack.c.bf16 %v910, %v909
      %v1036 = vpack.c.bf16 %v912, %v911
      %v1037 = vpack.c.bf16 %v914, %v913
      %v1038 = vpack.c.bf16 %v916, %v915
      %v1039 = vpack.c.bf16 %v918, %v917
      %v1040 = vpack.c.bf16 %v920, %v919
      %v1041 = vpack.c.bf16 %v922, %v921
      %v1043 = vshrl.u32 %v1034, 16
      %v1045 = vrot.slane %v1043, 7
      %v1046 = vshll.u32 %v1034, 16
      %v1048 = vor.u32 %v1045, %v1046
      %v1050 = vshrl.u32 %v1035, 16
      %v1052 = vrot.slane %v1050, 7
      %v1053 = vshll.u32 %v1035, 16
      %v1055 = vor.u32 %v1052, %v1053
      %v1056 = vsel %vm393, %v1045, %v1055
      %v1058 = vshrl.u32 %v1036, 16
      %v1060 = vrot.slane %v1058, 7
      %v1061 = vshll.u32 %v1036, 16
      %v1063 = vor.u32 %v1060, %v1061
      %v1064 = vsel %vm393, %v1052, %v1063
      %v1066 = vshrl.u32 %v1037, 16
      %v1068 = vrot.slane %v1066, 7
      %v1069 = vshll.u32 %v1037, 16
      %v1071 = vor.u32 %v1068, %v1069
      %v1072 = vsel %vm393, %v1060, %v1071
      %v1074 = vshrl.u32 %v1038, 16
      %v1076 = vrot.slane %v1074, 7
      %v1077 = vshll.u32 %v1038, 16
      %v1079 = vor.u32 %v1076, %v1077
      %v1080 = vsel %vm393, %v1068, %v1079
      %v1082 = vshrl.u32 %v1039, 16
      %v1084 = vrot.slane %v1082, 7
      %v1085 = vshll.u32 %v1039, 16
      %v1087 = vor.u32 %v1084, %v1085
      %v1088 = vsel %vm393, %v1076, %v1087
      %v1090 = vshrl.u32 %v1040, 16
      %v1092 = vrot.slane %v1090, 7
      %v1093 = vshll.u32 %v1040, 16
      %v1095 = vor.u32 %v1092, %v1093
      %v1096 = vsel %vm393, %v1084, %v1095
      %v1098 = vshrl.u32 %v1041, 16
      %v1100 = vrot.slane %v1098, 7
      %v1101 = vshll.u32 %v1041, 16
      %v1103 = vor.u32 %v1100, %v1101
      %v1104 = vsel %vm393, %v1092, %v1103
      %v1113 = vsel %vm466, %v1027, %v1048
      %v1114 = vrot.slane %v1046, 1
      %v1115 = vor.u32 %v1043, %v1114
      %v1116 = vrot.slane %v1053, 1
      %v1117 = vsel %vm468, %v1115, %v1116
      %v1118 = vor.u32 %v1050, %v1116
      %v1119 = vrot.slane %v1061, 1
      %v1120 = vsel %vm468, %v1118, %v1119
      %v1121 = vor.u32 %v1058, %v1119
      %v1122 = vrot.slane %v1069, 1
      %v1123 = vsel %vm468, %v1121, %v1122
      %v1124 = vor.u32 %v1066, %v1122
      %v1125 = vrot.slane %v1077, 1
      %v1126 = vsel %vm468, %v1124, %v1125
      %v1127 = vor.u32 %v1074, %v1125
      %v1128 = vrot.slane %v1085, 1
      %v1129 = vsel %vm468, %v1127, %v1128
      %v1130 = vor.u32 %v1082, %v1128
      %v1131 = vrot.slane %v1093, 1
      %v1132 = vsel %vm468, %v1130, %v1131
      %v1133 = vor.u32 %v1090, %v1131
      %v1134 = vrot.slane %v1101, 1
      %v1135 = vsel %vm468, %v1133, %v1134
      %v1136 = vor.u32 %v1098, %v1134
      %v1146 = vrot.slane %v1033, 1
      %v1148 = vsel %vm505, %v1136, %v1146
      %v1149 = vld [vmem:[%s4] sm:$0xf]
      %v1150 = vld [vmem:[%s4 + $0x4] sm:$0xf]
      %v1151 = vld [vmem:[%s4 + $0x8] sm:$0xf]
      %v1152 = vld [vmem:[%s4 + $0xc] sm:$0xf]
      %v1153 = vld [vmem:[%s4 + $0x10] sm:$0xf]
      %v1154 = vld [vmem:[%s4 + $0x14] sm:$0xf]
      %v1155 = vld [vmem:[%s4 + $0x18] sm:$0xf]
      %v1156 = vld [vmem:[%s4 + $0x1c] sm:$0xf]
      %v1157 = vld [vmem:[%s4 + $0x20] sm:$0xf]
      %v1158 = vld [vmem:[%s4 + $0x24] sm:$0xf]
      %v1159 = vld [vmem:[%s4 + $0x28] sm:$0xf]
      %v1160 = vld [vmem:[%s4 + $0x2c] sm:$0xf]
      %v1161 = vld [vmem:[%s4 + $0x30] sm:$0xf]
      %v1162 = vld [vmem:[%s4 + $0x34] sm:$0xf]
      %v1163 = vld [vmem:[%s4 + $0x38] sm:$0xf]
      %v1164 = vld [vmem:[%s4 + $0x3c] sm:$0xf]
      %v1165 = vld [vmem:[%s4 + $0x40] sm:$0xf]
      %v1166 = vld [vmem:[%s4 + $0x44] sm:$0xf]
      %v1167 = vld [vmem:[%s4 + $0x48] sm:$0xf]
      %v1168 = vld [vmem:[%s4 + $0x4c] sm:$0xf]
      %v1169 = vld [vmem:[%s4 + $0x50] sm:$0xf]
      %v1170 = vld [vmem:[%s4 + $0x54] sm:$0xf]
      %v1171 = vld [vmem:[%s4 + $0x58] sm:$0xf]
      %v1172 = vld [vmem:[%s4 + $0x5c] sm:$0xf]
      %v1173 = vld [vmem:[%s4 + $0x60] sm:$0xf]
      %v1174 = vld [vmem:[%s4 + $0x64] sm:$0xf]
      %v1175 = vld [vmem:[%s4 + $0x68] sm:$0xf]
      %v1176 = vld [vmem:[%s4 + $0x6c] sm:$0xf]
      %v1177 = vld [vmem:[%s4 + $0x70] sm:$0xf]
      %v1178 = vld [vmem:[%s4 + $0x74] sm:$0xf]
      %v1179 = vld [vmem:[%s4 + $0x78] sm:$0xf]
      %v1180 = vld [vmem:[%s4 + $0x7c] sm:$0xf]
      %v1181 = vld [vmem:[%s4 + $0x80] sm:$0xf]
      %v1182 = vld [vmem:[%s4 + $0x84] sm:$0xf]
      %v1183 = vld [vmem:[%s4 + $0x88] sm:$0xf]
      %v1184 = vld [vmem:[%s4 + $0x8c] sm:$0xf]
      %v1185 = vld [vmem:[%s4 + $0x90] sm:$0xf]
      %v1186 = vld [vmem:[%s4 + $0x94] sm:$0xf]
      %v1187 = vld [vmem:[%s4 + $0x98] sm:$0xf]
      %v1188 = vld [vmem:[%s4 + $0x9c] sm:$0xf]
      %v1189 = vld [vmem:[%s4 + $0xa0] sm:$0xf]
      %v1190 = vld [vmem:[%s4 + $0xa4] sm:$0xf]
      %v1191 = vld [vmem:[%s4 + $0xa8] sm:$0xf]
      %v1192 = vld [vmem:[%s4 + $0xac] sm:$0xf]
      %v1193 = vld [vmem:[%s4 + $0xb0] sm:$0xf]
      %v1194 = vld [vmem:[%s4 + $0xb4] sm:$0xf]
      %v1195 = vld [vmem:[%s4 + $0xb8] sm:$0xf]
      %v1196 = vld [vmem:[%s4 + $0xbc] sm:$0xf]
      %v1197 = vld [vmem:[%s4 + $0xc0] sm:$0xf]
      %v1198 = vld [vmem:[%s4 + $0xc4] sm:$0xf]
      %v1199 = vld [vmem:[%s4 + $0xc8] sm:$0xf]
      %v1200 = vld [vmem:[%s4 + $0xcc] sm:$0xf]
      %v1201 = vld [vmem:[%s4 + $0xd0] sm:$0xf]
      %v1202 = vld [vmem:[%s4 + $0xd4] sm:$0xf]
      %v1203 = vld [vmem:[%s4 + $0xd8] sm:$0xf]
      %v1204 = vld [vmem:[%s4 + $0xdc] sm:$0xf]
      %v1205 = vld [vmem:[%s4 + $0xe0] sm:$0xf]
      %v1206 = vld [vmem:[%s4 + $0xe4] sm:$0xf]
      %v1207 = vld [vmem:[%s4 + $0xe8] sm:$0xf]
      %v1208 = vld [vmem:[%s4 + $0xec] sm:$0xf]
      %v1209 = vld [vmem:[%s4 + $0xf0] sm:$0xf]
      %v1210 = vld [vmem:[%s4 + $0xf4] sm:$0xf]
      %v1211 = vld [vmem:[%s4 + $0xf8] sm:$0xf]
      %v1212 = vld [vmem:[%s4 + $0xfc] sm:$0xf]
      %v1213 = vld [vmem:[%s5] sm:$0x1]
      %v1215 = vlaneseq
      %v1216 = vshrl.u32 %v1215, 7
      %v1217 = vsub.s32 0, %v1216
      %v1218 = vrot.slane %v1213, %v1217
      %v1284 = vunpack.c.l.b16 %v1149
      %v1285 = vunpack.c.l.b16 %v1150
      %v1286 = vunpack.c.l.b16 %v1151
      %v1287 = vunpack.c.l.b16 %v1152
      %v1288 = vunpack.c.l.b16 %v1153
      %v1289 = vunpack.c.l.b16 %v1154
      %v1290 = vunpack.c.l.b16 %v1155
      %v1291 = vunpack.c.l.b16 %v1156
      %v1292 = vunpack.c.l.b16 %v1157
      %v1293 = vunpack.c.l.b16 %v1158
      %v1294 = vunpack.c.l.b16 %v1159
      %v1295 = vunpack.c.l.b16 %v1160
      %v1296 = vunpack.c.l.b16 %v1161
      %v1297 = vunpack.c.l.b16 %v1162
      %v1298 = vunpack.c.l.b16 %v1163
      %v1299 = vunpack.c.l.b16 %v1164
      %v1300 = vunpack.c.l.b16 %v1165
      %v1301 = vunpack.c.l.b16 %v1166
      %v1302 = vunpack.c.l.b16 %v1167
      %v1303 = vunpack.c.l.b16 %v1168
      %v1304 = vunpack.c.l.b16 %v1169
      %v1305 = vunpack.c.l.b16 %v1170
      %v1306 = vunpack.c.l.b16 %v1171
      %v1307 = vunpack.c.l.b16 %v1172
      %v1308 = vunpack.c.l.b16 %v1173
      %v1309 = vunpack.c.l.b16 %v1174
      %v1310 = vunpack.c.l.b16 %v1175
      %v1311 = vunpack.c.l.b16 %v1176
      %v1312 = vunpack.c.l.b16 %v1177
      %v1313 = vunpack.c.l.b16 %v1178
      %v1314 = vunpack.c.l.b16 %v1179
      %v1315 = vunpack.c.l.b16 %v1180
      %v1316 = vunpack.c.l.b16 %v1181
      %v1317 = vunpack.c.l.b16 %v1182
      %v1318 = vunpack.c.l.b16 %v1183
      %v1319 = vunpack.c.l.b16 %v1184
      %v1320 = vunpack.c.l.b16 %v1185
      %v1321 = vunpack.c.l.b16 %v1186
      %v1322 = vunpack.c.l.b16 %v1187
      %v1323 = vunpack.c.l.b16 %v1188
      %v1324 = vunpack.c.l.b16 %v1189
      %v1325 = vunpack.c.l.b16 %v1190
      %v1326 = vunpack.c.l.b16 %v1191
      %v1327 = vunpack.c.l.b16 %v1192
      %v1328 = vunpack.c.l.b16 %v1193
      %v1329 = vunpack.c.l.b16 %v1194
      %v1330 = vunpack.c.l.b16 %v1195
      %v1331 = vunpack.c.l.b16 %v1196
      %v1332 = vunpack.c.l.b16 %v1197
      %v1333 = vunpack.c.l.b16 %v1198
      %v1334 = vunpack.c.l.b16 %v1199
      %v1335 = vunpack.c.l.b16 %v1200
      %v1336 = vunpack.c.l.b16 %v1201
      %v1337 = vunpack.c.l.b16 %v1202
      %v1338 = vunpack.c.l.b16 %v1203
      %v1339 = vunpack.c.l.b16 %v1204
      %v1340 = vunpack.c.l.b16 %v1205
      %v1341 = vunpack.c.l.b16 %v1206
      %v1342 = vunpack.c.l.b16 %v1207
      %v1343 = vunpack.c.l.b16 %v1208
      %v1344 = vunpack.c.l.b16 %v1209
      %v1345 = vunpack.c.l.b16 %v1210
      %v1346 = vunpack.c.l.b16 %v1211
      %v1347 = vunpack.c.l.b16 %v1212
      %v1348 = vpack.c.b16 %v1285, %v1284
      %v1349 = vpack.c.b16 %v1287, %v1286
      %v1350 = vpack.c.b16 %v1289, %v1288
      %v1351 = vpack.c.b16 %v1291, %v1290
      %v1352 = vpack.c.b16 %v1293, %v1292
      %v1353 = vpack.c.b16 %v1295, %v1294
      %v1354 = vpack.c.b16 %v1297, %v1296
      %v1355 = vpack.c.b16 %v1299, %v1298
      %v1356 = vpack.c.b16 %v1301, %v1300
      %v1357 = vpack.c.b16 %v1303, %v1302
      %v1358 = vpack.c.b16 %v1305, %v1304
      %v1359 = vpack.c.b16 %v1307, %v1306
      %v1360 = vpack.c.b16 %v1309, %v1308
      %v1361 = vpack.c.b16 %v1311, %v1310
      %v1362 = vpack.c.b16 %v1313, %v1312
      %v1363 = vpack.c.b16 %v1315, %v1314
      %v1364 = vpack.c.b16 %v1317, %v1316
      %v1365 = vpack.c.b16 %v1319, %v1318
      %v1366 = vpack.c.b16 %v1321, %v1320
      %v1367 = vpack.c.b16 %v1323, %v1322
      %v1368 = vpack.c.b16 %v1325, %v1324
      %v1369 = vpack.c.b16 %v1327, %v1326
      %v1370 = vpack.c.b16 %v1329, %v1328
      %v1371 = vpack.c.b16 %v1331, %v1330
      %v1372 = vpack.c.b16 %v1333, %v1332
      %v1373 = vpack.c.b16 %v1335, %v1334
      %v1374 = vpack.c.b16 %v1337, %v1336
      %v1375 = vpack.c.b16 %v1339, %v1338
      %v1376 = vpack.c.b16 %v1341, %v1340
      %v1377 = vpack.c.b16 %v1343, %v1342
      %v1378 = vpack.c.b16 %v1345, %v1344
      %v1379 = vpack.c.b16 %v1347, %v1346
      %1412 = vmatprep.subr.bf16.mxu0 0
      %1413 = vmatpush1.bf16.msra.mxu0 %v1348
      %1414 = vmatprep.subr.bf16.mxu0 0
      %1415 = vmatpush1.bf16.msra.mxu0 %v1349
      %1416 = vmatprep.subr.bf16.mxu0 0
      %1417 = vmatpush1.bf16.msra.mxu0 %v1350
      %1418 = vmatprep.subr.bf16.mxu0 0
      %1419 = vmatpush1.bf16.msra.mxu0 %v1351
      %1420 = vmatprep.subr.bf16.mxu0 0
      %1421 = vmatpush1.bf16.msra.mxu0 %v1352
      %1422 = vmatprep.subr.bf16.mxu0 0
      %1423 = vmatpush1.bf16.msra.mxu0 %v1353
      %1424 = vmatprep.subr.bf16.mxu0 0
      %1425 = vmatpush1.bf16.msra.mxu0 %v1354
      %1426 = vmatprep.subr.bf16.mxu0 0
      %1427 = vmatpush1.bf16.msra.mxu0 %v1355
      %1428 = vmatprep.subr.bf16.mxu0 0
      %1429 = vmatpush1.bf16.msra.mxu0 %v1356
      %1430 = vmatprep.subr.bf16.mxu0 0
      %1431 = vmatpush1.bf16.msra.mxu0 %v1357
      %1432 = vmatprep.subr.bf16.mxu0 0
      %1433 = vmatpush1.bf16.msra.mxu0 %v1358
      %1434 = vmatprep.subr.bf16.mxu0 0
      %1435 = vmatpush1.bf16.msra.mxu0 %v1359
      %1436 = vmatprep.subr.bf16.mxu0 0
      %1437 = vmatpush1.bf16.msra.mxu0 %v1360
      %1438 = vmatprep.subr.bf16.mxu0 0
      %1439 = vmatpush1.bf16.msra.mxu0 %v1361
      %1440 = vmatprep.subr.bf16.mxu0 0
      %1441 = vmatpush1.bf16.msra.mxu0 %v1362
      %1442 = vmatprep.subr.bf16.mxu0 0
      %1443 = vmatpush1.bf16.msra.mxu0 %v1363
      %1444 = vmatprep.mubr.bf16.mxu0 %v1034
      %1445 = vmatmul.mubr.bf16.gmra.mrb[0].mxu0 %v1113
      %v1446 = vpop.f32.mrb[0].mxu0
      %v1447 = vadd.f32 %v1218, %v1446
      %v1448 = vpop.f32.mrb[0].mxu0
      %v1449 = vpop.f32.mrb[0].mxu0
      %v1450 = vadd.f32 %v1218, %v1449
      %v1451 = vpop.f32.mrb[0].mxu0
      %1452 = vmatprep.mubr.bf16.mxu0 %v1035
      %1453 = vmatmul.mubr.bf16.gmra.mrb[0].mxu0 %v1056
      %v1454 = vpop.f32.mrb[0].mxu0
      %v1455 = vadd.f32 %v1218, %v1454
      %v1456 = vpop.f32.mrb[0].mxu0
      %v1457 = vpop.f32.mrb[0].mxu0
      %v1458 = vadd.f32 %v1218, %v1457
      %v1459 = vpop.f32.mrb[0].mxu0
      %1460 = vmatprep.mubr.bf16.mxu0 %v1036
      %1461 = vmatmul.mubr.bf16.gmra.mrb[0].mxu0 %v1064
      %v1462 = vpop.f32.mrb[0].mxu0
      %v1463 = vadd.f32 %v1218, %v1462
      %v1464 = vpop.f32.mrb[0].mxu0
      %v1465 = vpop.f32.mrb[0].mxu0
      %v1466 = vadd.f32 %v1218, %v1465
      %v1467 = vpop.f32.mrb[0].mxu0
      %1468 = vmatprep.mubr.bf16.mxu0 %v1037
      %1469 = vmatmul.mubr.bf16.gmra.mrb[0].mxu0 %v1072
      %v1470 = vpop.f32.mrb[0].mxu0
      %v1471 = vadd.f32 %v1218, %v1470
      %v1472 = vpop.f32.mrb[0].mxu0
      %v1473 = vpop.f32.mrb[0].mxu0
      %v1474 = vadd.f32 %v1218, %v1473
      %v1475 = vpop.f32.mrb[0].mxu0
      %1476 = vmatprep.mubr.bf16.mxu0 %v1038
      %1477 = vmatmul.mubr.bf16.gmra.mrb[0].mxu0 %v1080
      %v1478 = vpop.f32.mrb[0].mxu0
      %v1479 = vadd.f32 %v1218, %v1478
      %v1480 = vpop.f32.mrb[0].mxu0
      %v1481 = vpop.f32.mrb[0].mxu0
      %v1482 = vadd.f32 %v1218, %v1481
      %v1483 = vpop.f32.mrb[0].mxu0
      %1484 = vmatprep.mubr.bf16.mxu0 %v1039
      %1485 = vmatmul.mubr.bf16.gmra.mrb[0].mxu0 %v1088
      %v1486 = vpop.f32.mrb[0].mxu0
      %v1487 = vadd.f32 %v1218, %v1486
      %v1488 = vpop.f32.mrb[0].mxu0
      %v1489 = vpop.f32.mrb[0].mxu0
      %v1490 = vadd.f32 %v1218, %v1489
      %v1491 = vpop.f32.mrb[0].mxu0
      %1492 = vmatprep.mubr.bf16.mxu0 %v1040
      %1493 = vmatmul.mubr.bf16.gmra.mrb[0].mxu0 %v1096
      %v1494 = vpop.f32.mrb[0].mxu0
      %v1495 = vadd.f32 %v1218, %v1494
      %v1496 = vpop.f32.mrb[0].mxu0
      %v1497 = vpop.f32.mrb[0].mxu0
      %v1498 = vadd.f32 %v1218, %v1497
      %v1499 = vpop.f32.mrb[0].mxu0
      %1500 = vmatprep.mubr.bf16.mxu0 %v1041
      %1501 = vmatmul.mubr.bf16.gmra.mrb[0].mxu0 %v1104
      %v1502 = vpop.f32.mrb[0].mxu0
      %v1503 = vadd.f32 %v1218, %v1502
      %v1504 = vpop.f32.mrb[0].mxu0
      %v1505 = vpop.f32.mrb[0].mxu0
      %v1506 = vadd.f32 %v1218, %v1505
      %v1507 = vpop.f32.mrb[0].mxu0
      %1508 = vdwg.mxu0
      %1509 = vmatprep.subr.bf16.mxu0 0
      %1510 = vmatpush1.bf16.msra.mxu0 %v1364
      %1511 = vmatprep.subr.bf16.mxu0 0
      %1512 = vmatpush1.bf16.msra.mxu0 %v1365
      %1513 = vmatprep.subr.bf16.mxu0 0
      %1514 = vmatpush1.bf16.msra.mxu0 %v1366
      %1515 = vmatprep.subr.bf16.mxu0 0
      %1516 = vmatpush1.bf16.msra.mxu0 %v1367
      %1517 = vmatprep.subr.bf16.mxu0 0
      %1518 = vmatpush1.bf16.msra.mxu0 %v1368
      %1519 = vmatprep.subr.bf16.mxu0 0
      %1520 = vmatpush1.bf16.msra.mxu0 %v1369
      %1521 = vmatprep.subr.bf16.mxu0 0
      %1522 = vmatpush1.bf16.msra.mxu0 %v1370
      %1523 = vmatprep.subr.bf16.mxu0 0
      %1524 = vmatpush1.bf16.msra.mxu0 %v1371
      %1525 = vmatprep.subr.bf16.mxu0 0
      %1526 = vmatpush1.bf16.msra.mxu0 %v1372
      %1527 = vmatprep.subr.bf16.mxu0 0
      %1528 = vmatpush1.bf16.msra.mxu0 %v1373
      %1529 = vmatprep.subr.bf16.mxu0 0
      %1530 = vmatpush1.bf16.msra.mxu0 %v1374
      %1531 = vmatprep.subr.bf16.mxu0 0
      %1532 = vmatpush1.bf16.msra.mxu0 %v1375
      %1533 = vmatprep.subr.bf16.mxu0 0
      %1534 = vmatpush1.bf16.msra.mxu0 %v1376
      %1535 = vmatprep.subr.bf16.mxu0 0
      %1536 = vmatpush1.bf16.msra.mxu0 %v1377
      %1537 = vmatprep.subr.bf16.mxu0 0
      %1538 = vmatpush1.bf16.msra.mxu0 %v1378
      %1539 = vmatprep.subr.bf16.mxu0 0
      %1540 = vmatpush1.bf16.msra.mxu0 %v1379
      %1541 = vmatprep.mubr.bf16.mxu0 %v385
      %1542 = vmatmul.mubr.bf16.gmra.mrb[0].mxu0 %v1117
      %v1543 = vpop.f32.mrb[0].mxu0
      %v1544 = vadd.f32 %v1447, %v1543
      %v1545 = vpop.f32.mrb[0].mxu0
      %v1546 = vpop.f32.mrb[0].mxu0
      %v1547 = vadd.f32 %v1450, %v1546
      %v1548 = vpop.f32.mrb[0].mxu0
      %1549 = vmatprep.mubr.bf16.mxu0 %v386
      %1550 = vmatmul.mubr.bf16.gmra.mrb[0].mxu0 %v1120
      %v1551 = vpop.f32.mrb[0].mxu0
      %v1552 = vadd.f32 %v1455, %v1551
      %v1553 = vpop.f32.mrb[0].mxu0
      %v1554 = vpop.f32.mrb[0].mxu0
      %v1555 = vadd.f32 %v1458, %v1554
      %v1556 = vpop.f32.mrb[0].mxu0
      %1557 = vmatprep.mubr.bf16.mxu0 %v387
      %1558 = vmatmul.mubr.bf16.gmra.mrb[0].mxu0 %v1123
      %v1559 = vpop.f32.mrb[0].mxu0
      %v1560 = vadd.f32 %v1463, %v1559
      %v1561 = vpop.f32.mrb[0].mxu0
      %v1562 = vpop.f32.mrb[0].mxu0
      %v1563 = vadd.f32 %v1466, %v1562
      %v1564 = vpop.f32.mrb[0].mxu0
      %1565 = vmatprep.mubr.bf16.mxu0 %v388
      %1566 = vmatmul.mubr.bf16.gmra.mrb[0].mxu0 %v1126
      %v1567 = vpop.f32.mrb[0].mxu0
      %v1568 = vadd.f32 %v1471, %v1567
      %v1569 = vpop.f32.mrb[0].mxu0
      %v1570 = vpop.f32.mrb[0].mxu0
      %v1571 = vadd.f32 %v1474, %v1570
      %v1572 = vpop.f32.mrb[0].mxu0
      %1573 = vmatprep.mubr.bf16.mxu0 %v389
      %1574 = vmatmul.mubr.bf16.gmra.mrb[0].mxu0 %v1129
      %v1575 = vpop.f32.mrb[0].mxu0
      %v1576 = vadd.f32 %v1479, %v1575
      %v1577 = vpop.f32.mrb[0].mxu0
      %v1578 = vpop.f32.mrb[0].mxu0
      %v1579 = vadd.f32 %v1482, %v1578
      %v1580 = vpop.f32.mrb[0].mxu0
      %1581 = vmatprep.mubr.bf16.mxu0 %v390
      %1582 = vmatmul.mubr.bf16.gmra.mrb[0].mxu0 %v1132
      %v1583 = vpop.f32.mrb[0].mxu0
      %v1584 = vadd.f32 %v1487, %v1583
      %v1585 = vpop.f32.mrb[0].mxu0
      %v1586 = vpop.f32.mrb[0].mxu0
      %v1587 = vadd.f32 %v1490, %v1586
      %v1588 = vpop.f32.mrb[0].mxu0
      %1589 = vmatprep.mubr.bf16.mxu0 %v391
      %1590 = vmatmul.mubr.bf16.gmra.mrb[0].mxu0 %v1135
      %v1591 = vpop.f32.mrb[0].mxu0
      %v1592 = vadd.f32 %v1495, %v1591
      %v1593 = vpop.f32.mrb[0].mxu0
      %v1594 = vpop.f32.mrb[0].mxu0
      %v1595 = vadd.f32 %v1498, %v1594
      %v1596 = vpop.f32.mrb[0].mxu0
      %1597 = vmatprep.mubr.bf16.mxu0 %v392
      %1598 = vmatmul.mubr.bf16.gmra.mrb[0].mxu0 %v1148
      %v1599 = vpop.f32.mrb[0].mxu0
      %v1600 = vadd.f32 %v1503, %v1599
      %v1601 = vpop.f32.mrb[0].mxu0
      %v1602 = vpop.f32.mrb[0].mxu0
      %v1603 = vadd.f32 %v1506, %v1602
      %v1604 = vpop.f32.mrb[0].mxu0
      %1605 = vdwg.mxu0
      %v1606 = vmax.f32 %v1544, 0.0
      %v1607 = vmax.f32 %v1547, 0.0
      %v1608 = vmax.f32 %v1552, 0.0
      %v1609 = vmax.f32 %v1555, 0.0
      %v1610 = vmax.f32 %v1560, 0.0
      %v1611 = vmax.f32 %v1563, 0.0
      %v1612 = vmax.f32 %v1568, 0.0
      %v1613 = vmax.f32 %v1571, 0.0
      %v1614 = vmax.f32 %v1576, 0.0
      %v1615 = vmax.f32 %v1579, 0.0
      %v1616 = vmax.f32 %v1584, 0.0
      %v1617 = vmax.f32 %v1587, 0.0
      %v1618 = vmax.f32 %v1592, 0.0
      %v1619 = vmax.f32 %v1595, 0.0
      %v1620 = vmax.f32 %v1600, 0.0
      %v1621 = vmax.f32 %v1603, 0.0
      %1622 = vst [vmem:[%s320] sm:$0xff] %v1606
      %1623 = vst [vmem:[%s320 + $0x8] sm:$0xff] %v1607
      %1624 = vst [vmem:[%s320 + $0x10] sm:$0xff] %v1608
      %1625 = vst [vmem:[%s320 + $0x18] sm:$0xff] %v1609
      %1626 = vst [vmem:[%s320 + $0x20] sm:$0xff] %v1610
      %1627 = vst [vmem:[%s320 + $0x28] sm:$0xff] %v1611
      %1628 = vst [vmem:[%s320 + $0x30] sm:$0xff] %v1612
      %1629 = vst [vmem:[%s320 + $0x38] sm:$0xff] %v1613
      %1630 = vst [vmem:[%s320 + $0x40] sm:$0xff] %v1614
      %1631 = vst [vmem:[%s320 + $0x48] sm:$0xff] %v1615
      %1632 = vst [vmem:[%s320 + $0x50] sm:$0xff] %v1616
      %1633 = vst [vmem:[%s320 + $0x58] sm:$0xff] %v1617
      %1634 = vst [vmem:[%s320 + $0x60] sm:$0xff] %v1618
      %1635 = vst [vmem:[%s320 + $0x68] sm:$0xff] %v1619
      %1636 = vst [vmem:[%s320 + $0x70] sm:$0xff] %v1620
      %1637 = vst [vmem:[%s320 + $0x78] sm:$0xff] %v1621
      %s1638 = smul.u32 16, %s22
      %p1639 = scmp.lt.s32.totalorder %s21, 1
      %s1640 = scalar_select %p1639, %s21, 1
      %p1641 = scmp.lt.s32.totalorder %s1638, 63
      %s1642 = scalar_select %p1641, %s1638, 63
      %s1643 = smul.addr %s1640, 64
      %s1644 = sadd.s32 %s1642, %s1643
      %s1645 = smul.addr %s1644, 8
      %s1646 = scalar_lea.vmem %s6, %s1645
      // Predicated region
      $region45: #{residual_block_pallas.1} parent=43 // pred_check
        %p1647 = pneg %p189
      $region46: #{residual_block_pallas.1} parent=43 // pred_check_branch
        %1649 = sbr.rel (%p1647) target = $region48
      $region47: #{residual_block_pallas.1} parent=43 // pred_region
        %s1650 = smul.u32 16, %s22
      $region48: #{residual_block_pallas.1} parent=43 // pred_fallthru
        _
    $region44: #{residual_block_pallas.1} parent=5 // pred_fallthru
      _
    %p1651 = scmp.le.s32.totalorder 2, %s12
    // Predicated region
    $region49: #{residual_block_pallas.1} parent=5 // pred_check
      %p1652 = pneg %p1651
    $region50: #{residual_block_pallas.1} parent=5 // pred_check_branch
      %1654 = sbr.rel (%p1652) target = $region52
    $region51: #{residual_block_pallas.1} parent=5 // pred_region
      %s1655 = ssub.s32 %s12, 2
      // Predicated region
      $region53: #{residual_block_pallas.1} parent=51 // pred_check
        %p1656 = pneg %p195
      $region54: #{residual_block_pallas.1} parent=51 // pred_check_branch
        %1658 = sbr.rel (%p1656) target = $region56
      $region55: #{residual_block_pallas.1} parent=51 // pred_region
        %s1659 = smul.u32 16, %s24
        %p1660 = scmp.lt.s32.totalorder %s23, 1
        %s1661 = scalar_select %p1660, %s23, 1
        %p1662 = scmp.lt.s32.totalorder %s1659, 63
        %s1663 = scalar_select %p1662, %s1659, 63
        %s1664 = smul.addr %s1661, 64
        %s1665 = sadd.s32 %s1663, %s1664
        %s1666 = smul.addr %s1665, 8
        %s1667 = scalar_lea.vmem %s6, %s1666
      $region56: #{residual_block_pallas.1} parent=51 // pred_fallthru
        _
    $region52: #{residual_block_pallas.1} parent=5 // pred_fallthru
      _
  $region6: #{residual_block_pallas.1} parent=0 // loop_footer
    %s16 = sadd.s32 1, %s12
  $region7: #{residual_block_pallas.1} parent=0 // loop_footer_branch
    %11 = sbr.rel target = $region3
  $region8: #{residual_block_pallas.1} parent=0 // loop_exit
    _

</llo_original>
